<compile_context>
chip_gen: v7x
topology: tpu7x:2x2x1
jax: 0.10.0
libtpu: 0.0.40
codegen_flags: <defaults>
</compile_context>

<pallas_src>
import functools

import jax
import jax.numpy as jnp
from jax import lax
from jax.experimental import pallas as pl
from jax.experimental.pallas import tpu as pltpu


def _round_up(x, m):
    return ((x + m - 1) // m) * m


def _nms_kernel(coords_ref, scores_ref, out_ref, *, M, score_threshold,
                nms_threshold):
    """Greedy per-(image, class) NMS over one block of sublane-packed rows.

    coords_ref : (4, R_blk, M_pad) planes [x1, y1, x2, y2]; each row is
                 pre-sorted by descending score along the lane (proposal) axis.
    scores_ref : (R_blk, M_pad) matching sorted scores; padding = -1e30.
    out_ref    : (R_blk, M_pad) masked scores: original score where the box is
                 kept, -1e30 otherwise (fused epilogue, feeds top_k directly).
    M          : real (unpadded) proposal count — static.
    """
    x1 = coords_ref[0]
    y1 = coords_ref[1]
    x2 = coords_ref[2]
    y2 = coords_ref[3]
    s = scores_ref[...]

    # Same predicates as the PyTorch reference: strict score threshold and
    # non-degenerate boxes.  Padded rows/lanes (score = -1e30) are never valid.
    valid = (s > score_threshold) & (x2 > x1) & (y2 > y1)

    # Hoisted threshold-scaled areas:
    #   iou > thr  <=>  inter * (1 + thr) > thr*area_i + thr*area_j
    w = jnp.maximum(x2 - x1, 0.0)
    h = jnp.maximum(y2 - y1, 0.0)
    thr_area = nms_threshold * (w * h)
    one_plus_thr = 1.0 + nms_threshold

    lane = lax.broadcasted_iota(jnp.int32, s.shape, 1)

    keep = valid  # boolean carried mask (single vreg of state)

    # Greedy NMS unrolled over the REAL proposal count M.  Boxes are sorted by
    # descending score, so greedy order == lane order.  The IoU math per pivot
    # is independent of `keep`; only the keep_i gate is on the serial chain.
    # TODO(synk): production-M path: precompute bitpacked suppression masks in
    #             one vectorized pass + lax.fori_loop(unroll=4..8) over pivots.
    for i in range(M):
        xi1 = x1[:, i:i + 1]
        yi1 = y1[:, i:i + 1]
        xi2 = x2[:, i:i + 1]
        yi2 = y2[:, i:i + 1]
        thr_ai = thr_area[:, i:i + 1]

        iw = jnp.maximum(jnp.minimum(xi2, x2) - jnp.maximum(xi1, x1), 0.0)
        ih = jnp.maximum(jnp.minimum(yi2, y2) - jnp.maximum(yi1, y1), 0.0)
        inter = iw * ih
        overlap = inter * one_plus_thr > (thr_ai + thr_area)

        keep_i = keep[:, i:i + 1]               # (R_blk, 1): is pivot i alive?
        kill = overlap & (lane > i) & keep_i
        keep = keep & jnp.logical_not(kill)

    # Fused epilogue: masked scores; unmasked full-sublane store.
    out_ref[...] = jnp.where(keep, s, -1e30)


class PredictionGenerator:
    """JAX/Pallas port of grasp_det_seg PredictionGenerator (no learned params)."""

    def __init__(self, nms_threshold, score_threshold, max_predictions,
                 rows_per_block=8):
        self.nms_threshold = float(nms_threshold)
        self.score_threshold = float(score_threshold)
        self.max_predictions = int(max_predictions)
        # Tiling knob (multiple of 8): v5e/v6e (single TC) -> prefer one big
        # grid step; v7x (dual TC) -> keep >=2 parallel steps.
        self.rows_per_block = int(rows_per_block)

    def __call__(self, boxes, scores):
        # boxes: (N, M, C, 4), scores: (N, M, C+1)
        N, M, C, _ = boxes.shape
        M_pad = _round_up(M, 128)
        R = N * C
        rows_blk = max(8, _round_up(self.rows_per_block, 8))
        R_pad = _round_up(R, rows_blk)

        # Merge (image, class) into one sublane-packed row axis.
        #   scores (N, M, C+1) -> drop background -> (R, M)
        #   boxes  (N, M, C, 4) -> (4, R, M)
        sc = jnp.transpose(scores[:, :, 1:], (0, 2, 1)).reshape(R, M)
        sc = sc.astype(jnp.float32)
        bx = jnp.transpose(boxes, (3, 0, 2, 1)).reshape(4, R, M)
        bx = bx.astype(jnp.float32)

        # Per-row sort by descending score; single fused gather for all coords.
        order = jnp.argsort(-sc, axis=-1)                         # (R, M)
        sc_s = jnp.take_along_axis(sc, order, axis=-1)
        bx_s = jnp.take_along_axis(
            bx, jnp.broadcast_to(order[None], (4, R, M)), axis=-1)

        sc_p = jnp.pad(sc_s, ((0, R_pad - R), (0, M_pad - M)),
                       constant_values=-1e30)
        bx_p = jnp.pad(bx_s, ((0, 0), (0, R_pad - R), (0, M_pad - M)))

        kernel = functools.partial(
            _nms_kernel,
            M=M,
            score_threshold=self.score_threshold,
            nms_threshold=self.nms_threshold,
        )
        masked = pl.pallas_call(
            kernel,
            out_shape=jax.ShapeDtypeStruct((R_pad, M_pad), jnp.float32),
            grid_spec=pltpu.PrefetchScalarGridSpec(
                num_scalar_prefetch=0,
                grid=(R_pad // rows_blk,),
                in_specs=[
                    pl.BlockSpec((4, rows_blk, M_pad), lambda g: (0, g, 0)),
                    pl.BlockSpec((rows_blk, M_pad), lambda g: (g, 0)),
                ],
                out_specs=pl.BlockSpec((rows_blk, M_pad), lambda g: (g, 0)),
            ),
            compiler_params=pltpu.CompilerParams(
                dimension_semantics=("parallel",)),
        )(bx_p, sc_p)

        # ---- glue: merge classes per image, keep at most max_predictions ----
        masked_img = masked[:R].reshape(N, C * M_pad)
        cls_flat = jnp.broadcast_to(
            jnp.repeat(jnp.arange(C, dtype=jnp.int32), M_pad)[None, :],
            (N, C * M_pad))
        bbx_flat = jnp.transpose(bx_p[:, :R, :], (1, 2, 0)).reshape(
            N, C * M_pad, 4)

        obj_pred, idx = lax.top_k(masked_img, self.max_predictions)
        valid = obj_pred > self.score_threshold   # kept boxes strictly exceed it
        cls_pred = jnp.take_along_axis(cls_flat, idx, axis=1)
        bbx_pred = jnp.take_along_axis(bbx_flat, idx[:, :, None], axis=1)
        obj_pred = jnp.where(valid, obj_pred, 0.0)
        bbx_pred = jnp.where(valid[:, :, None], bbx_pred, 0.0)
        cls_pred = jnp.where(valid, cls_pred, -1)

        # TODO(synk): the reference returns ragged PackedSequences with None
        # entries; fixed-size padded outputs + a `valid` mask are returned here.
        return bbx_pred, cls_pred, obj_pred, valid


if __name__ == "__main__":
    key = jax.random.PRNGKey(0)
    k1, k2, k3 = jax.random.split(key, 3)

    N, M, C = 2, 24, 4  # 2 images, 24 proposals, 4 thing classes (+ background)

    # Deterministic synthetic boxes: some degenerate (negative width/height).
    xy1 = jax.random.uniform(k1, (N, M, C, 2), dtype=jnp.float32) * 50.0
    wh = jax.random.uniform(k2, (N, M, C, 2), dtype=jnp.float32) * 30.0 - 5.0
    boxes = jnp.concatenate([xy1, xy1 + wh], axis=-1)           # (N, M, C, 4)

    logits = jax.random.normal(k3, (N, M, C + 1), dtype=jnp.float32)
    scores = jax.nn.softmax(logits, axis=-1)                    # (N, M, C+1)

    module = PredictionGenerator(nms_threshold=0.5,
                                 score_threshold=0.05,
                                 max_predictions=10)

    bbx_pred, cls_pred, obj_pred, valid = module(boxes, scores)
    jax.block_until_ready((bbx_pred, cls_pred, obj_pred, valid))

    assert bbx_pred.shape == (N, 10, 4)
    assert cls_pred.shape == (N, 10)
    assert obj_pred.shape == (N, 10)
    assert valid.shape == (N, 10)
    # Kept detections must be non-degenerate and above the score threshold.
    ok_box = (bbx_pred[..., 2] > bbx_pred[..., 0]) & \
             (bbx_pred[..., 3] > bbx_pred[..., 1])
    assert bool(jnp.all(jnp.where(valid, ok_box, True)))
    assert bool(jnp.all(jnp.where(valid, obj_pred > 0.05, True)))
    assert bool(jnp.all(jnp.where(valid, (cls_pred >= 0) & (cls_pred < C), True)))

    print("KERNEL_OK")
</pallas_src>

<mosaic_0001>
module attributes {stable_mosaic.version = 11 : i64} {
  func.func @_nms_kernel(%arg0: i32, %arg1: memref<4x8x128xf32, #tpu.memory_space<vmem>>, %arg2: memref<8x128xf32, #tpu.memory_space<vmem>>, %arg3: memref<8x128xf32, #tpu.memory_space<vmem>>) attributes {dimension_semantics = [#tpu.dimension_semantics<parallel>], iteration_bounds = array<i64: 1>, scalar_prefetch = 0 : i64, scratch_operands = 0 : i64, tpu.core_type = #tpu.core_type<tc>, window_params = [{transform_indices = @transform_0, window_bounds = array<i64: 4, 8, 128>}, {transform_indices = @transform_1, window_bounds = array<i64: 8, 128>}, {transform_indices = @transform_2, window_bounds = array<i64: 8, 128>}]} {
    %c0 = arith.constant 0 : index
    %c0_0 = arith.constant 0 : index
    %c0_1 = arith.constant 0 : index
    %0 = vector.load %arg1[%c0, %c0_0, %c0_1] : memref<4x8x128xf32, #tpu.memory_space<vmem>>, vector<1x8x128xf32>
    %1 = vector.shape_cast %0 : vector<1x8x128xf32> to vector<8x128xf32>
    %c1 = arith.constant 1 : index
    %c0_2 = arith.constant 0 : index
    %c0_3 = arith.constant 0 : index
    %2 = vector.load %arg1[%c1, %c0_2, %c0_3] : memref<4x8x128xf32, #tpu.memory_space<vmem>>, vector<1x8x128xf32>
    %3 = vector.shape_cast %2 : vector<1x8x128xf32> to vector<8x128xf32>
    %c2 = arith.constant 2 : index
    %c0_4 = arith.constant 0 : index
    %c0_5 = arith.constant 0 : index
    %4 = vector.load %arg1[%c2, %c0_4, %c0_5] : memref<4x8x128xf32, #tpu.memory_space<vmem>>, vector<1x8x128xf32>
    %5 = vector.shape_cast %4 : vector<1x8x128xf32> to vector<8x128xf32>
    %c3 = arith.constant 3 : index
    %c0_6 = arith.constant 0 : index
    %c0_7 = arith.constant 0 : index
    %6 = vector.load %arg1[%c3, %c0_6, %c0_7] : memref<4x8x128xf32, #tpu.memory_space<vmem>>, vector<1x8x128xf32>
    %7 = vector.shape_cast %6 : vector<1x8x128xf32> to vector<8x128xf32>
    %c0_8 = arith.constant 0 : index
    %c0_9 = arith.constant 0 : index
    %8 = vector.load %arg2[%c0_8, %c0_9] : memref<8x128xf32, #tpu.memory_space<vmem>>, vector<8x128xf32>
    %cst = arith.constant 5.000000e-02 : f32
    %9 = vector.broadcast %cst : f32 to vector<8x128xf32>
    %10 = arith.cmpf ogt, %8, %9 : vector<8x128xf32>
    %11 = arith.cmpf ogt, %5, %1 : vector<8x128xf32>
    %12 = arith.andi %10, %11 : vector<8x128xi1>
    %13 = arith.cmpf ogt, %7, %3 : vector<8x128xf32>
    %14 = arith.andi %12, %13 : vector<8x128xi1>
    %15 = arith.subf %5, %1 : vector<8x128xf32>
    %cst_10 = arith.constant 0.000000e+00 : f32
    %16 = vector.broadcast %cst_10 : f32 to vector<8x128xf32>
    %17 = arith.maximumf %15, %16 : vector<8x128xf32>
    %18 = arith.subf %7, %3 : vector<8x128xf32>
    %cst_11 = arith.constant 0.000000e+00 : f32
    %19 = vector.broadcast %cst_11 : f32 to vector<8x128xf32>
    %20 = arith.maximumf %18, %19 : vector<8x128xf32>
    %21 = arith.mulf %17, %20 : vector<8x128xf32>
    %cst_12 = arith.constant 5.000000e-01 : f32
    %22 = vector.broadcast %cst_12 : f32 to vector<8x128xf32>
    %23 = arith.mulf %22, %21 : vector<8x128xf32>
    %24 = tpu.iota {dimensions = array<i32: 1>} : vector<8x128xi32>
    %25 = vector.extract_strided_slice %1 {offsets = [0, 0], sizes = [8, 1], strides = [1, 1]} : vector<8x128xf32> to vector<8x1xf32>
    %26 = vector.extract_strided_slice %3 {offsets = [0, 0], sizes = [8, 1], strides = [1, 1]} : vector<8x128xf32> to vector<8x1xf32>
    %27 = vector.extract_strided_slice %5 {offsets = [0, 0], sizes = [8, 1], strides = [1, 1]} : vector<8x128xf32> to vector<8x1xf32>
    %28 = vector.extract_strided_slice %7 {offsets = [0, 0], sizes = [8, 1], strides = [1, 1]} : vector<8x128xf32> to vector<8x1xf32>
    %29 = vector.extract_strided_slice %23 {offsets = [0, 0], sizes = [8, 1], strides = [1, 1]} : vector<8x128xf32> to vector<8x1xf32>
    %30 = vector.broadcast %27 : vector<8x1xf32> to vector<8x128xf32>
    %31 = arith.minimumf %30, %5 : vector<8x128xf32>
    %32 = vector.broadcast %25 : vector<8x1xf32> to vector<8x128xf32>
    %33 = arith.maximumf %32, %1 : vector<8x128xf32>
    %34 = arith.subf %31, %33 : vector<8x128xf32>
    %cst_13 = arith.constant 0.000000e+00 : f32
    %35 = vector.broadcast %cst_13 : f32 to vector<8x128xf32>
    %36 = arith.maximumf %34, %35 : vector<8x128xf32>
    %37 = vector.broadcast %28 : vector<8x1xf32> to vector<8x128xf32>
    %38 = arith.minimumf %37, %7 : vector<8x128xf32>
    %39 = vector.broadcast %26 : vector<8x1xf32> to vector<8x128xf32>
    %40 = arith.maximumf %39, %3 : vector<8x128xf32>
    %41 = arith.subf %38, %40 : vector<8x128xf32>
    %cst_14 = arith.constant 0.000000e+00 : f32
    %42 = vector.broadcast %cst_14 : f32 to vector<8x128xf32>
    %43 = arith.maximumf %41, %42 : vector<8x128xf32>
    %44 = arith.mulf %36, %43 : vector<8x128xf32>
    %cst_15 = arith.constant 1.500000e+00 : f32
    %45 = vector.broadcast %cst_15 : f32 to vector<8x128xf32>
    %46 = arith.mulf %44, %45 : vector<8x128xf32>
    %47 = vector.broadcast %29 : vector<8x1xf32> to vector<8x128xf32>
    %48 = arith.addf %47, %23 : vector<8x128xf32>
    %49 = arith.cmpf ogt, %46, %48 : vector<8x128xf32>
    %50 = vector.extract_strided_slice %14 {offsets = [0, 0], sizes = [8, 1], strides = [1, 1]} : vector<8x128xi1> to vector<8x1xi1>
    %c0_i32 = arith.constant 0 : i32
    %51 = vector.broadcast %c0_i32 : i32 to vector<8x128xi32>
    %52 = arith.cmpi sgt, %24, %51 : vector<8x128xi32>
    %53 = arith.andi %49, %52 : vector<8x128xi1>
    %54 = vector.broadcast %50 : vector<8x1xi1> to vector<8x128xi1>
    %55 = arith.andi %53, %54 : vector<8x128xi1>
    %cst_16 = arith.constant dense<true> : vector<8x128xi1>
    %56 = arith.xori %55, %cst_16 : vector<8x128xi1>
    %57 = arith.andi %14, %56 : vector<8x128xi1>
    %58 = vector.extract_strided_slice %1 {offsets = [0, 1], sizes = [8, 1], strides = [1, 1]} : vector<8x128xf32> to vector<8x1xf32>
    %59 = vector.extract_strided_slice %3 {offsets = [0, 1], sizes = [8, 1], strides = [1, 1]} : vector<8x128xf32> to vector<8x1xf32>
    %60 = vector.extract_strided_slice %5 {offsets = [0, 1], sizes = [8, 1], strides = [1, 1]} : vector<8x128xf32> to vector<8x1xf32>
    %61 = vector.extract_strided_slice %7 {offsets = [0, 1], sizes = [8, 1], strides = [1, 1]} : vector<8x128xf32> to vector<8x1xf32>
    %62 = vector.extract_strided_slice %23 {offsets = [0, 1], sizes = [8, 1], strides = [1, 1]} : vector<8x128xf32> to vector<8x1xf32>
    %63 = vector.broadcast %60 : vector<8x1xf32> to vector<8x128xf32>
    %64 = arith.minimumf %63, %5 : vector<8x128xf32>
    %65 = vector.broadcast %58 : vector<8x1xf32> to vector<8x128xf32>
    %66 = arith.maximumf %65, %1 : vector<8x128xf32>
    %67 = arith.subf %64, %66 : vector<8x128xf32>
    %cst_17 = arith.constant 0.000000e+00 : f32
    %68 = vector.broadcast %cst_17 : f32 to vector<8x128xf32>
    %69 = arith.maximumf %67, %68 : vector<8x128xf32>
    %70 = vector.broadcast %61 : vector<8x1xf32> to vector<8x128xf32>
    %71 = arith.minimumf %70, %7 : vector<8x128xf32>
    %72 = vector.broadcast %59 : vector<8x1xf32> to vector<8x128xf32>
    %73 = arith.maximumf %72, %3 : vector<8x128xf32>
    %74 = arith.subf %71, %73 : vector<8x128xf32>
    %cst_18 = arith.constant 0.000000e+00 : f32
    %75 = vector.broadcast %cst_18 : f32 to vector<8x128xf32>
    %76 = arith.maximumf %74, %75 : vector<8x128xf32>
    %77 = arith.mulf %69, %76 : vector<8x128xf32>
    %cst_19 = arith.constant 1.500000e+00 : f32
    %78 = vector.broadcast %cst_19 : f32 to vector<8x128xf32>
    %79 = arith.mulf %77, %78 : vector<8x128xf32>
    %80 = vector.broadcast %62 : vector<8x1xf32> to vector<8x128xf32>
    %81 = arith.addf %80, %23 : vector<8x128xf32>
    %82 = arith.cmpf ogt, %79, %81 : vector<8x128xf32>
    %83 = vector.extract_strided_slice %57 {offsets = [0, 1], sizes = [8, 1], strides = [1, 1]} : vector<8x128xi1> to vector<8x1xi1>
    %c1_i32 = arith.constant 1 : i32
    %84 = vector.broadcast %c1_i32 : i32 to vector<8x128xi32>
    %85 = arith.cmpi sgt, %24, %84 : vector<8x128xi32>
    %86 = arith.andi %82, %85 : vector<8x128xi1>
    %87 = vector.broadcast %83 : vector<8x1xi1> to vector<8x128xi1>
    %88 = arith.andi %86, %87 : vector<8x128xi1>
    %cst_20 = arith.constant dense<true> : vector<8x128xi1>
    %89 = arith.xori %88, %cst_20 : vector<8x128xi1>
    %90 = arith.andi %57, %89 : vector<8x128xi1>
    %91 = vector.extract_strided_slice %1 {offsets = [0, 2], sizes = [8, 1], strides = [1, 1]} : vector<8x128xf32> to vector<8x1xf32>
    %92 = vector.extract_strided_slice %3 {offsets = [0, 2], sizes = [8, 1], strides = [1, 1]} : vector<8x128xf32> to vector<8x1xf32>
    %93 = vector.extract_strided_slice %5 {offsets = [0, 2], sizes = [8, 1], strides = [1, 1]} : vector<8x128xf32> to vector<8x1xf32>
    %94 = vector.extract_strided_slice %7 {offsets = [0, 2], sizes = [8, 1], strides = [1, 1]} : vector<8x128xf32> to vector<8x1xf32>
    %95 = vector.extract_strided_slice %23 {offsets = [0, 2], sizes = [8, 1], strides = [1, 1]} : vector<8x128xf32> to vector<8x1xf32>
    %96 = vector.broadcast %93 : vector<8x1xf32> to vector<8x128xf32>
    %97 = arith.minimumf %96, %5 : vector<8x128xf32>
    %98 = vector.broadcast %91 : vector<8x1xf32> to vector<8x128xf32>
    %99 = arith.maximumf %98, %1 : vector<8x128xf32>
    %100 = arith.subf %97, %99 : vector<8x128xf32>
    %cst_21 = arith.constant 0.000000e+00 : f32
    %101 = vector.broadcast %cst_21 : f32 to vector<8x128xf32>
    %102 = arith.maximumf %100, %101 : vector<8x128xf32>
    %103 = vector.broadcast %94 : vector<8x1xf32> to vector<8x128xf32>
    %104 = arith.minimumf %103, %7 : vector<8x128xf32>
    %105 = vector.broadcast %92 : vector<8x1xf32> to vector<8x128xf32>
    %106 = arith.maximumf %105, %3 : vector<8x128xf32>
    %107 = arith.subf %104, %106 : vector<8x128xf32>
    %cst_22 = arith.constant 0.000000e+00 : f32
    %108 = vector.broadcast %cst_22 : f32 to vector<8x128xf32>
    %109 = arith.maximumf %107, %108 : vector<8x128xf32>
    %110 = arith.mulf %102, %109 : vector<8x128xf32>
    %cst_23 = arith.constant 1.500000e+00 : f32
    %111 = vector.broadcast %cst_23 : f32 to vector<8x128xf32>
    %112 = arith.mulf %110, %111 : vector<8x128xf32>
    %113 = vector.broadcast %95 : vector<8x1xf32> to vector<8x128xf32>
    %114 = arith.addf %113, %23 : vector<8x128xf32>
    %115 = arith.cmpf ogt, %112, %114 : vector<8x128xf32>
    %116 = vector.extract_strided_slice %90 {offsets = [0, 2], sizes = [8, 1], strides = [1, 1]} : vector<8x128xi1> to vector<8x1xi1>
    %c2_i32 = arith.constant 2 : i32
    %117 = vector.broadcast %c2_i32 : i32 to vector<8x128xi32>
    %118 = arith.cmpi sgt, %24, %117 : vector<8x128xi32>
    %119 = arith.andi %115, %118 : vector<8x128xi1>
    %120 = vector.broadcast %116 : vector<8x1xi1> to vector<8x128xi1>
    %121 = arith.andi %119, %120 : vector<8x128xi1>
    %cst_24 = arith.constant dense<true> : vector<8x128xi1>
    %122 = arith.xori %121, %cst_24 : vector<8x128xi1>
    %123 = arith.andi %90, %122 : vector<8x128xi1>
    %124 = vector.extract_strided_slice %1 {offsets = [0, 3], sizes = [8, 1], strides = [1, 1]} : vector<8x128xf32> to vector<8x1xf32>
    %125 = vector.extract_strided_slice %3 {offsets = [0, 3], sizes = [8, 1], strides = [1, 1]} : vector<8x128xf32> to vector<8x1xf32>
    %126 = vector.extract_strided_slice %5 {offsets = [0, 3], sizes = [8, 1], strides = [1, 1]} : vector<8x128xf32> to vector<8x1xf32>
    %127 = vector.extract_strided_slice %7 {offsets = [0, 3], sizes = [8, 1], strides = [1, 1]} : vector<8x128xf32> to vector<8x1xf32>
    %128 = vector.extract_strided_slice %23 {offsets = [0, 3], sizes = [8, 1], strides = [1, 1]} : vector<8x128xf32> to vector<8x1xf32>
    %129 = vector.broadcast %126 : vector<8x1xf32> to vector<8x128xf32>
    %130 = arith.minimumf %129, %5 : vector<8x128xf32>
    %131 = vector.broadcast %124 : vector<8x1xf32> to vector<8x128xf32>
    %132 = arith.maximumf %131, %1 : vector<8x128xf32>
    %133 = arith.subf %130, %132 : vector<8x128xf32>
    %cst_25 = arith.constant 0.000000e+00 : f32
    %134 = vector.broadcast %cst_25 : f32 to vector<8x128xf32>
    %135 = arith.maximumf %133, %134 : vector<8x128xf32>
    %136 = vector.broadcast %127 : vector<8x1xf32> to vector<8x128xf32>
    %137 = arith.minimumf %136, %7 : vector<8x128xf32>
    %138 = vector.broadcast %125 : vector<8x1xf32> to vector<8x128xf32>
    %139 = arith.maximumf %138, %3 : vector<8x128xf32>
    %140 = arith.subf %137, %139 : vector<8x128xf32>
    %cst_26 = arith.constant 0.000000e+00 : f32
    %141 = vector.broadcast %cst_26 : f32 to vector<8x128xf32>
    %142 = arith.maximumf %140, %141 : vector<8x128xf32>
    %143 = arith.mulf %135, %142 : vector<8x128xf32>
    %cst_27 = arith.constant 1.500000e+00 : f32
    %144 = vector.broadcast %cst_27 : f32 to vector<8x128xf32>
    %145 = arith.mulf %143, %144 : vector<8x128xf32>
    %146 = vector.broadcast %128 : vector<8x1xf32> to vector<8x128xf32>
    %147 = arith.addf %146, %23 : vector<8x128xf32>
    %148 = arith.cmpf ogt, %145, %147 : vector<8x128xf32>
    %149 = vector.extract_strided_slice %123 {offsets = [0, 3], sizes = [8, 1], strides = [1, 1]} : vector<8x128xi1> to vector<8x1xi1>
    %c3_i32 = arith.constant 3 : i32
    %150 = vector.broadcast %c3_i32 : i32 to vector<8x128xi32>
    %151 = arith.cmpi sgt, %24, %150 : vector<8x128xi32>
    %152 = arith.andi %148, %151 : vector<8x128xi1>
    %153 = vector.broadcast %149 : vector<8x1xi1> to vector<8x128xi1>
    %154 = arith.andi %152, %153 : vector<8x128xi1>
    %cst_28 = arith.constant dense<true> : vector<8x128xi1>
    %155 = arith.xori %154, %cst_28 : vector<8x128xi1>
    %156 = arith.andi %123, %155 : vector<8x128xi1>
    %157 = vector.extract_strided_slice %1 {offsets = [0, 4], sizes = [8, 1], strides = [1, 1]} : vector<8x128xf32> to vector<8x1xf32>
    %158 = vector.extract_strided_slice %3 {offsets = [0, 4], sizes = [8, 1], strides = [1, 1]} : vector<8x128xf32> to vector<8x1xf32>
    %159 = vector.extract_strided_slice %5 {offsets = [0, 4], sizes = [8, 1], strides = [1, 1]} : vector<8x128xf32> to vector<8x1xf32>
    %160 = vector.extract_strided_slice %7 {offsets = [0, 4], sizes = [8, 1], strides = [1, 1]} : vector<8x128xf32> to vector<8x1xf32>
    %161 = vector.extract_strided_slice %23 {offsets = [0, 4], sizes = [8, 1], strides = [1, 1]} : vector<8x128xf32> to vector<8x1xf32>
    %162 = vector.broadcast %159 : vector<8x1xf32> to vector<8x128xf32>
    %163 = arith.minimumf %162, %5 : vector<8x128xf32>
    %164 = vector.broadcast %157 : vector<8x1xf32> to vector<8x128xf32>
    %165 = arith.maximumf %164, %1 : vector<8x128xf32>
    %166 = arith.subf %163, %165 : vector<8x128xf32>
    %cst_29 = arith.constant 0.000000e+00 : f32
    %167 = vector.broadcast %cst_29 : f32 to vector<8x128xf32>
    %168 = arith.maximumf %166, %167 : vector<8x128xf32>
    %169 = vector.broadcast %160 : vector<8x1xf32> to vector<8x128xf32>
    %170 = arith.minimumf %169, %7 : vector<8x128xf32>
    %171 = vector.broadcast %158 : vector<8x1xf32> to vector<8x128xf32>
    %172 = arith.maximumf %171, %3 : vector<8x128xf32>
    %173 = arith.subf %170, %172 : vector<8x128xf32>
    %cst_30 = arith.constant 0.000000e+00 : f32
    %174 = vector.broadcast %cst_30 : f32 to vector<8x128xf32>
    %175 = arith.maximumf %173, %174 : vector<8x128xf32>
    %176 = arith.mulf %168, %175 : vector<8x128xf32>
    %cst_31 = arith.constant 1.500000e+00 : f32
    %177 = vector.broadcast %cst_31 : f32 to vector<8x128xf32>
    %178 = arith.mulf %176, %177 : vector<8x128xf32>
    %179 = vector.broadcast %161 : vector<8x1xf32> to vector<8x128xf32>
    %180 = arith.addf %179, %23 : vector<8x128xf32>
    %181 = arith.cmpf ogt, %178, %180 : vector<8x128xf32>
    %182 = vector.extract_strided_slice %156 {offsets = [0, 4], sizes = [8, 1], strides = [1, 1]} : vector<8x128xi1> to vector<8x1xi1>
    %c4_i32 = arith.constant 4 : i32
    %183 = vector.broadcast %c4_i32 : i32 to vector<8x128xi32>
    %184 = arith.cmpi sgt, %24, %183 : vector<8x128xi32>
    %185 = arith.andi %181, %184 : vector<8x128xi1>
    %186 = vector.broadcast %182 : vector<8x1xi1> to vector<8x128xi1>
    %187 = arith.andi %185, %186 : vector<8x128xi1>
    %cst_32 = arith.constant dense<true> : vector<8x128xi1>
    %188 = arith.xori %187, %cst_32 : vector<8x128xi1>
    %189 = arith.andi %156, %188 : vector<8x128xi1>
    %190 = vector.extract_strided_slice %1 {offsets = [0, 5], sizes = [8, 1], strides = [1, 1]} : vector<8x128xf32> to vector<8x1xf32>
    %191 = vector.extract_strided_slice %3 {offsets = [0, 5], sizes = [8, 1], strides = [1, 1]} : vector<8x128xf32> to vector<8x1xf32>
    %192 = vector.extract_strided_slice %5 {offsets = [0, 5], sizes = [8, 1], strides = [1, 1]} : vector<8x128xf32> to vector<8x1xf32>
    %193 = vector.extract_strided_slice %7 {offsets = [0, 5], sizes = [8, 1], strides = [1, 1]} : vector<8x128xf32> to vector<8x1xf32>
    %194 = vector.extract_strided_slice %23 {offsets = [0, 5], sizes = [8, 1], strides = [1, 1]} : vector<8x128xf32> to vector<8x1xf32>
    %195 = vector.broadcast %192 : vector<8x1xf32> to vector<8x128xf32>
    %196 = arith.minimumf %195, %5 : vector<8x128xf32>
    %197 = vector.broadcast %190 : vector<8x1xf32> to vector<8x128xf32>
    %198 = arith.maximumf %197, %1 : vector<8x128xf32>
    %199 = arith.subf %196, %198 : vector<8x128xf32>
    %cst_33 = arith.constant 0.000000e+00 : f32
    %200 = vector.broadcast %cst_33 : f32 to vector<8x128xf32>
    %201 = arith.maximumf %199, %200 : vector<8x128xf32>
    %202 = vector.broadcast %193 : vector<8x1xf32> to vector<8x128xf32>
    %203 = arith.minimumf %202, %7 : vector<8x128xf32>
    %204 = vector.broadcast %191 : vector<8x1xf32> to vector<8x128xf32>
    %205 = arith.maximumf %204, %3 : vector<8x128xf32>
    %206 = arith.subf %203, %205 : vector<8x128xf32>
    %cst_34 = arith.constant 0.000000e+00 : f32
    %207 = vector.broadcast %cst_34 : f32 to vector<8x128xf32>
    %208 = arith.maximumf %206, %207 : vector<8x128xf32>
    %209 = arith.mulf %201, %208 : vector<8x128xf32>
    %cst_35 = arith.constant 1.500000e+00 : f32
    %210 = vector.broadcast %cst_35 : f32 to vector<8x128xf32>
    %211 = arith.mulf %209, %210 : vector<8x128xf32>
    %212 = vector.broadcast %194 : vector<8x1xf32> to vector<8x128xf32>
    %213 = arith.addf %212, %23 : vector<8x128xf32>
    %214 = arith.cmpf ogt, %211, %213 : vector<8x128xf32>
    %215 = vector.extract_strided_slice %189 {offsets = [0, 5], sizes = [8, 1], strides = [1, 1]} : vector<8x128xi1> to vector<8x1xi1>
    %c5_i32 = arith.constant 5 : i32
    %216 = vector.broadcast %c5_i32 : i32 to vector<8x128xi32>
    %217 = arith.cmpi sgt, %24, %216 : vector<8x128xi32>
    %218 = arith.andi %214, %217 : vector<8x128xi1>
    %219 = vector.broadcast %215 : vector<8x1xi1> to vector<8x128xi1>
    %220 = arith.andi %218, %219 : vector<8x128xi1>
    %cst_36 = arith.constant dense<true> : vector<8x128xi1>
    %221 = arith.xori %220, %cst_36 : vector<8x128xi1>
    %222 = arith.andi %189, %221 : vector<8x128xi1>
    %223 = vector.extract_strided_slice %1 {offsets = [0, 6], sizes = [8, 1], strides = [1, 1]} : vector<8x128xf32> to vector<8x1xf32>
    %224 = vector.extract_strided_slice %3 {offsets = [0, 6], sizes = [8, 1], strides = [1, 1]} : vector<8x128xf32> to vector<8x1xf32>
    %225 = vector.extract_strided_slice %5 {offsets = [0, 6], sizes = [8, 1], strides = [1, 1]} : vector<8x128xf32> to vector<8x1xf32>
    %226 = vector.extract_strided_slice %7 {offsets = [0, 6], sizes = [8, 1], strides = [1, 1]} : vector<8x128xf32> to vector<8x1xf32>
    %227 = vector.extract_strided_slice %23 {offsets = [0, 6], sizes = [8, 1], strides = [1, 1]} : vector<8x128xf32> to vector<8x1xf32>
    %228 = vector.broadcast %225 : vector<8x1xf32> to vector<8x128xf32>
    %229 = arith.minimumf %228, %5 : vector<8x128xf32>
    %230 = vector.broadcast %223 : vector<8x1xf32> to vector<8x128xf32>
    %231 = arith.maximumf %230, %1 : vector<8x128xf32>
    %232 = arith.subf %229, %231 : vector<8x128xf32>
    %cst_37 = arith.constant 0.000000e+00 : f32
    %233 = vector.broadcast %cst_37 : f32 to vector<8x128xf32>
    %234 = arith.maximumf %232, %233 : vector<8x128xf32>
    %235 = vector.broadcast %226 : vector<8x1xf32> to vector<8x128xf32>
    %236 = arith.minimumf %235, %7 : vector<8x128xf32>
    %237 = vector.broadcast %224 : vector<8x1xf32> to vector<8x128xf32>
    %238 = arith.maximumf %237, %3 : vector<8x128xf32>
    %239 = arith.subf %236, %238 : vector<8x128xf32>
    %cst_38 = arith.constant 0.000000e+00 : f32
    %240 = vector.broadcast %cst_38 : f32 to vector<8x128xf32>
    %241 = arith.maximumf %239, %240 : vector<8x128xf32>
    %242 = arith.mulf %234, %241 : vector<8x128xf32>
    %cst_39 = arith.constant 1.500000e+00 : f32
    %243 = vector.broadcast %cst_39 : f32 to vector<8x128xf32>
    %244 = arith.mulf %242, %243 : vector<8x128xf32>
    %245 = vector.broadcast %227 : vector<8x1xf32> to vector<8x128xf32>
    %246 = arith.addf %245, %23 : vector<8x128xf32>
    %247 = arith.cmpf ogt, %244, %246 : vector<8x128xf32>
    %248 = vector.extract_strided_slice %222 {offsets = [0, 6], sizes = [8, 1], strides = [1, 1]} : vector<8x128xi1> to vector<8x1xi1>
    %c6_i32 = arith.constant 6 : i32
    %249 = vector.broadcast %c6_i32 : i32 to vector<8x128xi32>
    %250 = arith.cmpi sgt, %24, %249 : vector<8x128xi32>
    %251 = arith.andi %247, %250 : vector<8x128xi1>
    %252 = vector.broadcast %248 : vector<8x1xi1> to vector<8x128xi1>
    %253 = arith.andi %251, %252 : vector<8x128xi1>
    %cst_40 = arith.constant dense<true> : vector<8x128xi1>
    %254 = arith.xori %253, %cst_40 : vector<8x128xi1>
    %255 = arith.andi %222, %254 : vector<8x128xi1>
    %256 = vector.extract_strided_slice %1 {offsets = [0, 7], sizes = [8, 1], strides = [1, 1]} : vector<8x128xf32> to vector<8x1xf32>
    %257 = vector.extract_strided_slice %3 {offsets = [0, 7], sizes = [8, 1], strides = [1, 1]} : vector<8x128xf32> to vector<8x1xf32>
    %258 = vector.extract_strided_slice %5 {offsets = [0, 7], sizes = [8, 1], strides = [1, 1]} : vector<8x128xf32> to vector<8x1xf32>
    %259 = vector.extract_strided_slice %7 {offsets = [0, 7], sizes = [8, 1], strides = [1, 1]} : vector<8x128xf32> to vector<8x1xf32>
    %260 = vector.extract_strided_slice %23 {offsets = [0, 7], sizes = [8, 1], strides = [1, 1]} : vector<8x128xf32> to vector<8x1xf32>
    %261 = vector.broadcast %258 : vector<8x1xf32> to vector<8x128xf32>
    %262 = arith.minimumf %261, %5 : vector<8x128xf32>
    %263 = vector.broadcast %256 : vector<8x1xf32> to vector<8x128xf32>
    %264 = arith.maximumf %263, %1 : vector<8x128xf32>
    %265 = arith.subf %262, %264 : vector<8x128xf32>
    %cst_41 = arith.constant 0.000000e+00 : f32
    %266 = vector.broadcast %cst_41 : f32 to vector<8x128xf32>
    %267 = arith.maximumf %265, %266 : vector<8x128xf32>
    %268 = vector.broadcast %259 : vector<8x1xf32> to vector<8x128xf32>
    %269 = arith.minimumf %268, %7 : vector<8x128xf32>
    %270 = vector.broadcast %257 : vector<8x1xf32> to vector<8x128xf32>
    %271 = arith.maximumf %270, %3 : vector<8x128xf32>
    %272 = arith.subf %269, %271 : vector<8x128xf32>
    %cst_42 = arith.constant 0.000000e+00 : f32
    %273 = vector.broadcast %cst_42 : f32 to vector<8x128xf32>
    %274 = arith.maximumf %272, %273 : vector<8x128xf32>
    %275 = arith.mulf %267, %274 : vector<8x128xf32>
    %cst_43 = arith.constant 1.500000e+00 : f32
    %276 = vector.broadcast %cst_43 : f32 to vector<8x128xf32>
    %277 = arith.mulf %275, %276 : vector<8x128xf32>
    %278 = vector.broadcast %260 : vector<8x1xf32> to vector<8x128xf32>
    %279 = arith.addf %278, %23 : vector<8x128xf32>
    %280 = arith.cmpf ogt, %277, %279 : vector<8x128xf32>
    %281 = vector.extract_strided_slice %255 {offsets = [0, 7], sizes = [8, 1], strides = [1, 1]} : vector<8x128xi1> to vector<8x1xi1>
    %c7_i32 = arith.constant 7 : i32
    %282 = vector.broadcast %c7_i32 : i32 to vector<8x128xi32>
    %283 = arith.cmpi sgt, %24, %282 : vector<8x128xi32>
    %284 = arith.andi %280, %283 : vector<8x128xi1>
    %285 = vector.broadcast %281 : vector<8x1xi1> to vector<8x128xi1>
    %286 = arith.andi %284, %285 : vector<8x128xi1>
    %cst_44 = arith.constant dense<true> : vector<8x128xi1>
    %287 = arith.xori %286, %cst_44 : vector<8x128xi1>
    %288 = arith.andi %255, %287 : vector<8x128xi1>
    %289 = vector.extract_strided_slice %1 {offsets = [0, 8], sizes = [8, 1], strides = [1, 1]} : vector<8x128xf32> to vector<8x1xf32>
    %290 = vector.extract_strided_slice %3 {offsets = [0, 8], sizes = [8, 1], strides = [1, 1]} : vector<8x128xf32> to vector<8x1xf32>
    %291 = vector.extract_strided_slice %5 {offsets = [0, 8], sizes = [8, 1], strides = [1, 1]} : vector<8x128xf32> to vector<8x1xf32>
    %292 = vector.extract_strided_slice %7 {offsets = [0, 8], sizes = [8, 1], strides = [1, 1]} : vector<8x128xf32> to vector<8x1xf32>
    %293 = vector.extract_strided_slice %23 {offsets = [0, 8], sizes = [8, 1], strides = [1, 1]} : vector<8x128xf32> to vector<8x1xf32>
    %294 = vector.broadcast %291 : vector<8x1xf32> to vector<8x128xf32>
    %295 = arith.minimumf %294, %5 : vector<8x128xf32>
    %296 = vector.broadcast %289 : vector<8x1xf32> to vector<8x128xf32>
    %297 = arith.maximumf %296, %1 : vector<8x128xf32>
    %298 = arith.subf %295, %297 : vector<8x128xf32>
    %cst_45 = arith.constant 0.000000e+00 : f32
    %299 = vector.broadcast %cst_45 : f32 to vector<8x128xf32>
    %300 = arith.maximumf %298, %299 : vector<8x128xf32>
    %301 = vector.broadcast %292 : vector<8x1xf32> to vector<8x128xf32>
    %302 = arith.minimumf %301, %7 : vector<8x128xf32>
    %303 = vector.broadcast %290 : vector<8x1xf32> to vector<8x128xf32>
    %304 = arith.maximumf %303, %3 : vector<8x128xf32>
    %305 = arith.subf %302, %304 : vector<8x128xf32>
    %cst_46 = arith.constant 0.000000e+00 : f32
    %306 = vector.broadcast %cst_46 : f32 to vector<8x128xf32>
    %307 = arith.maximumf %305, %306 : vector<8x128xf32>
    %308 = arith.mulf %300, %307 : vector<8x128xf32>
    %cst_47 = arith.constant 1.500000e+00 : f32
    %309 = vector.broadcast %cst_47 : f32 to vector<8x128xf32>
    %310 = arith.mulf %308, %309 : vector<8x128xf32>
    %311 = vector.broadcast %293 : vector<8x1xf32> to vector<8x128xf32>
    %312 = arith.addf %311, %23 : vector<8x128xf32>
    %313 = arith.cmpf ogt, %310, %312 : vector<8x128xf32>
    %314 = vector.extract_strided_slice %288 {offsets = [0, 8], sizes = [8, 1], strides = [1, 1]} : vector<8x128xi1> to vector<8x1xi1>
    %c8_i32 = arith.constant 8 : i32
    %315 = vector.broadcast %c8_i32 : i32 to vector<8x128xi32>
    %316 = arith.cmpi sgt, %24, %315 : vector<8x128xi32>
    %317 = arith.andi %313, %316 : vector<8x128xi1>
    %318 = vector.broadcast %314 : vector<8x1xi1> to vector<8x128xi1>
    %319 = arith.andi %317, %318 : vector<8x128xi1>
    %cst_48 = arith.constant dense<true> : vector<8x128xi1>
    %320 = arith.xori %319, %cst_48 : vector<8x128xi1>
    %321 = arith.andi %288, %320 : vector<8x128xi1>
    %322 = vector.extract_strided_slice %1 {offsets = [0, 9], sizes = [8, 1], strides = [1, 1]} : vector<8x128xf32> to vector<8x1xf32>
    %323 = vector.extract_strided_slice %3 {offsets = [0, 9], sizes = [8, 1], strides = [1, 1]} : vector<8x128xf32> to vector<8x1xf32>
    %324 = vector.extract_strided_slice %5 {offsets = [0, 9], sizes = [8, 1], strides = [1, 1]} : vector<8x128xf32> to vector<8x1xf32>
    %325 = vector.extract_strided_slice %7 {offsets = [0, 9], sizes = [8, 1], strides = [1, 1]} : vector<8x128xf32> to vector<8x1xf32>
    %326 = vector.extract_strided_slice %23 {offsets = [0, 9], sizes = [8, 1], strides = [1, 1]} : vector<8x128xf32> to vector<8x1xf32>
    %327 = vector.broadcast %324 : vector<8x1xf32> to vector<8x128xf32>
    %328 = arith.minimumf %327, %5 : vector<8x128xf32>
    %329 = vector.broadcast %322 : vector<8x1xf32> to vector<8x128xf32>
    %330 = arith.maximumf %329, %1 : vector<8x128xf32>
    %331 = arith.subf %328, %330 : vector<8x128xf32>
    %cst_49 = arith.constant 0.000000e+00 : f32
    %332 = vector.broadcast %cst_49 : f32 to vector<8x128xf32>
    %333 = arith.maximumf %331, %332 : vector<8x128xf32>
    %334 = vector.broadcast %325 : vector<8x1xf32> to vector<8x128xf32>
    %335 = arith.minimumf %334, %7 : vector<8x128xf32>
    %336 = vector.broadcast %323 : vector<8x1xf32> to vector<8x128xf32>
    %337 = arith.maximumf %336, %3 : vector<8x128xf32>
    %338 = arith.subf %335, %337 : vector<8x128xf32>
    %cst_50 = arith.constant 0.000000e+00 : f32
    %339 = vector.broadcast %cst_50 : f32 to vector<8x128xf32>
    %340 = arith.maximumf %338, %339 : vector<8x128xf32>
    %341 = arith.mulf %333, %340 : vector<8x128xf32>
    %cst_51 = arith.constant 1.500000e+00 : f32
    %342 = vector.broadcast %cst_51 : f32 to vector<8x128xf32>
    %343 = arith.mulf %341, %342 : vector<8x128xf32>
    %344 = vector.broadcast %326 : vector<8x1xf32> to vector<8x128xf32>
    %345 = arith.addf %344, %23 : vector<8x128xf32>
    %346 = arith.cmpf ogt, %343, %345 : vector<8x128xf32>
    %347 = vector.extract_strided_slice %321 {offsets = [0, 9], sizes = [8, 1], strides = [1, 1]} : vector<8x128xi1> to vector<8x1xi1>
    %c9_i32 = arith.constant 9 : i32
    %348 = vector.broadcast %c9_i32 : i32 to vector<8x128xi32>
    %349 = arith.cmpi sgt, %24, %348 : vector<8x128xi32>
    %350 = arith.andi %346, %349 : vector<8x128xi1>
    %351 = vector.broadcast %347 : vector<8x1xi1> to vector<8x128xi1>
    %352 = arith.andi %350, %351 : vector<8x128xi1>
    %cst_52 = arith.constant dense<true> : vector<8x128xi1>
    %353 = arith.xori %352, %cst_52 : vector<8x128xi1>
    %354 = arith.andi %321, %353 : vector<8x128xi1>
    %355 = vector.extract_strided_slice %1 {offsets = [0, 10], sizes = [8, 1], strides = [1, 1]} : vector<8x128xf32> to vector<8x1xf32>
    %356 = vector.extract_strided_slice %3 {offsets = [0, 10], sizes = [8, 1], strides = [1, 1]} : vector<8x128xf32> to vector<8x1xf32>
    %357 = vector.extract_strided_slice %5 {offsets = [0, 10], sizes = [8, 1], strides = [1, 1]} : vector<8x128xf32> to vector<8x1xf32>
    %358 = vector.extract_strided_slice %7 {offsets = [0, 10], sizes = [8, 1], strides = [1, 1]} : vector<8x128xf32> to vector<8x1xf32>
    %359 = vector.extract_strided_slice %23 {offsets = [0, 10], sizes = [8, 1], strides = [1, 1]} : vector<8x128xf32> to vector<8x1xf32>
    %360 = vector.broadcast %357 : vector<8x1xf32> to vector<8x128xf32>
    %361 = arith.minimumf %360, %5 : vector<8x128xf32>
    %362 = vector.broadcast %355 : vector<8x1xf32> to vector<8x128xf32>
    %363 = arith.maximumf %362, %1 : vector<8x128xf32>
    %364 = arith.subf %361, %363 : vector<8x128xf32>
    %cst_53 = arith.constant 0.000000e+00 : f32
    %365 = vector.broadcast %cst_53 : f32 to vector<8x128xf32>
    %366 = arith.maximumf %364, %365 : vector<8x128xf32>
    %367 = vector.broadcast %358 : vector<8x1xf32> to vector<8x128xf32>
    %368 = arith.minimumf %367, %7 : vector<8x128xf32>
    %369 = vector.broadcast %356 : vector<8x1xf32> to vector<8x128xf32>
    %370 = arith.maximumf %369, %3 : vector<8x128xf32>
    %371 = arith.subf %368, %370 : vector<8x128xf32>
    %cst_54 = arith.constant 0.000000e+00 : f32
    %372 = vector.broadcast %cst_54 : f32 to vector<8x128xf32>
    %373 = arith.maximumf %371, %372 : vector<8x128xf32>
    %374 = arith.mulf %366, %373 : vector<8x128xf32>
    %cst_55 = arith.constant 1.500000e+00 : f32
    %375 = vector.broadcast %cst_55 : f32 to vector<8x128xf32>
    %376 = arith.mulf %374, %375 : vector<8x128xf32>
    %377 = vector.broadcast %359 : vector<8x1xf32> to vector<8x128xf32>
    %378 = arith.addf %377, %23 : vector<8x128xf32>
    %379 = arith.cmpf ogt, %376, %378 : vector<8x128xf32>
    %380 = vector.extract_strided_slice %354 {offsets = [0, 10], sizes = [8, 1], strides = [1, 1]} : vector<8x128xi1> to vector<8x1xi1>
    %c10_i32 = arith.constant 10 : i32
    %381 = vector.broadcast %c10_i32 : i32 to vector<8x128xi32>
    %382 = arith.cmpi sgt, %24, %381 : vector<8x128xi32>
    %383 = arith.andi %379, %382 : vector<8x128xi1>
    %384 = vector.broadcast %380 : vector<8x1xi1> to vector<8x128xi1>
    %385 = arith.andi %383, %384 : vector<8x128xi1>
    %cst_56 = arith.constant dense<true> : vector<8x128xi1>
    %386 = arith.xori %385, %cst_56 : vector<8x128xi1>
    %387 = arith.andi %354, %386 : vector<8x128xi1>
    %388 = vector.extract_strided_slice %1 {offsets = [0, 11], sizes = [8, 1], strides = [1, 1]} : vector<8x128xf32> to vector<8x1xf32>
    %389 = vector.extract_strided_slice %3 {offsets = [0, 11], sizes = [8, 1], strides = [1, 1]} : vector<8x128xf32> to vector<8x1xf32>
    %390 = vector.extract_strided_slice %5 {offsets = [0, 11], sizes = [8, 1], strides = [1, 1]} : vector<8x128xf32> to vector<8x1xf32>
    %391 = vector.extract_strided_slice %7 {offsets = [0, 11], sizes = [8, 1], strides = [1, 1]} : vector<8x128xf32> to vector<8x1xf32>
    %392 = vector.extract_strided_slice %23 {offsets = [0, 11], sizes = [8, 1], strides = [1, 1]} : vector<8x128xf32> to vector<8x1xf32>
    %393 = vector.broadcast %390 : vector<8x1xf32> to vector<8x128xf32>
    %394 = arith.minimumf %393, %5 : vector<8x128xf32>
    %395 = vector.broadcast %388 : vector<8x1xf32> to vector<8x128xf32>
    %396 = arith.maximumf %395, %1 : vector<8x128xf32>
    %397 = arith.subf %394, %396 : vector<8x128xf32>
    %cst_57 = arith.constant 0.000000e+00 : f32
    %398 = vector.broadcast %cst_57 : f32 to vector<8x128xf32>
    %399 = arith.maximumf %397, %398 : vector<8x128xf32>
    %400 = vector.broadcast %391 : vector<8x1xf32> to vector<8x128xf32>
    %401 = arith.minimumf %400, %7 : vector<8x128xf32>
    %402 = vector.broadcast %389 : vector<8x1xf32> to vector<8x128xf32>
    %403 = arith.maximumf %402, %3 : vector<8x128xf32>
    %404 = arith.subf %401, %403 : vector<8x128xf32>
    %cst_58 = arith.constant 0.000000e+00 : f32
    %405 = vector.broadcast %cst_58 : f32 to vector<8x128xf32>
    %406 = arith.maximumf %404, %405 : vector<8x128xf32>
    %407 = arith.mulf %399, %406 : vector<8x128xf32>
    %cst_59 = arith.constant 1.500000e+00 : f32
    %408 = vector.broadcast %cst_59 : f32 to vector<8x128xf32>
    %409 = arith.mulf %407, %408 : vector<8x128xf32>
    %410 = vector.broadcast %392 : vector<8x1xf32> to vector<8x128xf32>
    %411 = arith.addf %410, %23 : vector<8x128xf32>
    %412 = arith.cmpf ogt, %409, %411 : vector<8x128xf32>
    %413 = vector.extract_strided_slice %387 {offsets = [0, 11], sizes = [8, 1], strides = [1, 1]} : vector<8x128xi1> to vector<8x1xi1>
    %c11_i32 = arith.constant 11 : i32
    %414 = vector.broadcast %c11_i32 : i32 to vector<8x128xi32>
    %415 = arith.cmpi sgt, %24, %414 : vector<8x128xi32>
    %416 = arith.andi %412, %415 : vector<8x128xi1>
    %417 = vector.broadcast %413 : vector<8x1xi1> to vector<8x128xi1>
    %418 = arith.andi %416, %417 : vector<8x128xi1>
    %cst_60 = arith.constant dense<true> : vector<8x128xi1>
    %419 = arith.xori %418, %cst_60 : vector<8x128xi1>
    %420 = arith.andi %387, %419 : vector<8x128xi1>
    %421 = vector.extract_strided_slice %1 {offsets = [0, 12], sizes = [8, 1], strides = [1, 1]} : vector<8x128xf32> to vector<8x1xf32>
    %422 = vector.extract_strided_slice %3 {offsets = [0, 12], sizes = [8, 1], strides = [1, 1]} : vector<8x128xf32> to vector<8x1xf32>
    %423 = vector.extract_strided_slice %5 {offsets = [0, 12], sizes = [8, 1], strides = [1, 1]} : vector<8x128xf32> to vector<8x1xf32>
    %424 = vector.extract_strided_slice %7 {offsets = [0, 12], sizes = [8, 1], strides = [1, 1]} : vector<8x128xf32> to vector<8x1xf32>
    %425 = vector.extract_strided_slice %23 {offsets = [0, 12], sizes = [8, 1], strides = [1, 1]} : vector<8x128xf32> to vector<8x1xf32>
    %426 = vector.broadcast %423 : vector<8x1xf32> to vector<8x128xf32>
    %427 = arith.minimumf %426, %5 : vector<8x128xf32>
    %428 = vector.broadcast %421 : vector<8x1xf32> to vector<8x128xf32>
    %429 = arith.maximumf %428, %1 : vector<8x128xf32>
    %430 = arith.subf %427, %429 : vector<8x128xf32>
    %cst_61 = arith.constant 0.000000e+00 : f32
    %431 = vector.broadcast %cst_61 : f32 to vector<8x128xf32>
    %432 = arith.maximumf %430, %431 : vector<8x128xf32>
    %433 = vector.broadcast %424 : vector<8x1xf32> to vector<8x128xf32>
    %434 = arith.minimumf %433, %7 : vector<8x128xf32>
    %435 = vector.broadcast %422 : vector<8x1xf32> to vector<8x128xf32>
    %436 = arith.maximumf %435, %3 : vector<8x128xf32>
    %437 = arith.subf %434, %436 : vector<8x128xf32>
    %cst_62 = arith.constant 0.000000e+00 : f32
    %438 = vector.broadcast %cst_62 : f32 to vector<8x128xf32>
    %439 = arith.maximumf %437, %438 : vector<8x128xf32>
    %440 = arith.mulf %432, %439 : vector<8x128xf32>
    %cst_63 = arith.constant 1.500000e+00 : f32
    %441 = vector.broadcast %cst_63 : f32 to vector<8x128xf32>
    %442 = arith.mulf %440, %441 : vector<8x128xf32>
    %443 = vector.broadcast %425 : vector<8x1xf32> to vector<8x128xf32>
    %444 = arith.addf %443, %23 : vector<8x128xf32>
    %445 = arith.cmpf ogt, %442, %444 : vector<8x128xf32>
    %446 = vector.extract_strided_slice %420 {offsets = [0, 12], sizes = [8, 1], strides = [1, 1]} : vector<8x128xi1> to vector<8x1xi1>
    %c12_i32 = arith.constant 12 : i32
    %447 = vector.broadcast %c12_i32 : i32 to vector<8x128xi32>
    %448 = arith.cmpi sgt, %24, %447 : vector<8x128xi32>
    %449 = arith.andi %445, %448 : vector<8x128xi1>
    %450 = vector.broadcast %446 : vector<8x1xi1> to vector<8x128xi1>
    %451 = arith.andi %449, %450 : vector<8x128xi1>
    %cst_64 = arith.constant dense<true> : vector<8x128xi1>
    %452 = arith.xori %451, %cst_64 : vector<8x128xi1>
    %453 = arith.andi %420, %452 : vector<8x128xi1>
    %454 = vector.extract_strided_slice %1 {offsets = [0, 13], sizes = [8, 1], strides = [1, 1]} : vector<8x128xf32> to vector<8x1xf32>
    %455 = vector.extract_strided_slice %3 {offsets = [0, 13], sizes = [8, 1], strides = [1, 1]} : vector<8x128xf32> to vector<8x1xf32>
    %456 = vector.extract_strided_slice %5 {offsets = [0, 13], sizes = [8, 1], strides = [1, 1]} : vector<8x128xf32> to vector<8x1xf32>
    %457 = vector.extract_strided_slice %7 {offsets = [0, 13], sizes = [8, 1], strides = [1, 1]} : vector<8x128xf32> to vector<8x1xf32>
    %458 = vector.extract_strided_slice %23 {offsets = [0, 13], sizes = [8, 1], strides = [1, 1]} : vector<8x128xf32> to vector<8x1xf32>
    %459 = vector.broadcast %456 : vector<8x1xf32> to vector<8x128xf32>
    %460 = arith.minimumf %459, %5 : vector<8x128xf32>
    %461 = vector.broadcast %454 : vector<8x1xf32> to vector<8x128xf32>
    %462 = arith.maximumf %461, %1 : vector<8x128xf32>
    %463 = arith.subf %460, %462 : vector<8x128xf32>
    %cst_65 = arith.constant 0.000000e+00 : f32
    %464 = vector.broadcast %cst_65 : f32 to vector<8x128xf32>
    %465 = arith.maximumf %463, %464 : vector<8x128xf32>
    %466 = vector.broadcast %457 : vector<8x1xf32> to vector<8x128xf32>
    %467 = arith.minimumf %466, %7 : vector<8x128xf32>
    %468 = vector.broadcast %455 : vector<8x1xf32> to vector<8x128xf32>
    %469 = arith.maximumf %468, %3 : vector<8x128xf32>
    %470 = arith.subf %467, %469 : vector<8x128xf32>
    %cst_66 = arith.constant 0.000000e+00 : f32
    %471 = vector.broadcast %cst_66 : f32 to vector<8x128xf32>
    %472 = arith.maximumf %470, %471 : vector<8x128xf32>
    %473 = arith.mulf %465, %472 : vector<8x128xf32>
    %cst_67 = arith.constant 1.500000e+00 : f32
    %474 = vector.broadcast %cst_67 : f32 to vector<8x128xf32>
    %475 = arith.mulf %473, %474 : vector<8x128xf32>
    %476 = vector.broadcast %458 : vector<8x1xf32> to vector<8x128xf32>
    %477 = arith.addf %476, %23 : vector<8x128xf32>
    %478 = arith.cmpf ogt, %475, %477 : vector<8x128xf32>
    %479 = vector.extract_strided_slice %453 {offsets = [0, 13], sizes = [8, 1], strides = [1, 1]} : vector<8x128xi1> to vector<8x1xi1>
    %c13_i32 = arith.constant 13 : i32
    %480 = vector.broadcast %c13_i32 : i32 to vector<8x128xi32>
    %481 = arith.cmpi sgt, %24, %480 : vector<8x128xi32>
    %482 = arith.andi %478, %481 : vector<8x128xi1>
    %483 = vector.broadcast %479 : vector<8x1xi1> to vector<8x128xi1>
    %484 = arith.andi %482, %483 : vector<8x128xi1>
    %cst_68 = arith.constant dense<true> : vector<8x128xi1>
    %485 = arith.xori %484, %cst_68 : vector<8x128xi1>
    %486 = arith.andi %453, %485 : vector<8x128xi1>
    %487 = vector.extract_strided_slice %1 {offsets = [0, 14], sizes = [8, 1], strides = [1, 1]} : vector<8x128xf32> to vector<8x1xf32>
    %488 = vector.extract_strided_slice %3 {offsets = [0, 14], sizes = [8, 1], strides = [1, 1]} : vector<8x128xf32> to vector<8x1xf32>
    %489 = vector.extract_strided_slice %5 {offsets = [0, 14], sizes = [8, 1], strides = [1, 1]} : vector<8x128xf32> to vector<8x1xf32>
    %490 = vector.extract_strided_slice %7 {offsets = [0, 14], sizes = [8, 1], strides = [1, 1]} : vector<8x128xf32> to vector<8x1xf32>
    %491 = vector.extract_strided_slice %23 {offsets = [0, 14], sizes = [8, 1], strides = [1, 1]} : vector<8x128xf32> to vector<8x1xf32>
    %492 = vector.broadcast %489 : vector<8x1xf32> to vector<8x128xf32>
    %493 = arith.minimumf %492, %5 : vector<8x128xf32>
    %494 = vector.broadcast %487 : vector<8x1xf32> to vector<8x128xf32>
    %495 = arith.maximumf %494, %1 : vector<8x128xf32>
    %496 = arith.subf %493, %495 : vector<8x128xf32>
    %cst_69 = arith.constant 0.000000e+00 : f32
    %497 = vector.broadcast %cst_69 : f32 to vector<8x128xf32>
    %498 = arith.maximumf %496, %497 : vector<8x128xf32>
    %499 = vector.broadcast %490 : vector<8x1xf32> to vector<8x128xf32>
    %500 = arith.minimumf %499, %7 : vector<8x128xf32>
    %501 = vector.broadcast %488 : vector<8x1xf32> to vector<8x128xf32>
    %502 = arith.maximumf %501, %3 : vector<8x128xf32>
    %503 = arith.subf %500, %502 : vector<8x128xf32>
    %cst_70 = arith.constant 0.000000e+00 : f32
    %504 = vector.broadcast %cst_70 : f32 to vector<8x128xf32>
    %505 = arith.maximumf %503, %504 : vector<8x128xf32>
    %506 = arith.mulf %498, %505 : vector<8x128xf32>
    %cst_71 = arith.constant 1.500000e+00 : f32
    %507 = vector.broadcast %cst_71 : f32 to vector<8x128xf32>
    %508 = arith.mulf %506, %507 : vector<8x128xf32>
    %509 = vector.broadcast %491 : vector<8x1xf32> to vector<8x128xf32>
    %510 = arith.addf %509, %23 : vector<8x128xf32>
    %511 = arith.cmpf ogt, %508, %510 : vector<8x128xf32>
    %512 = vector.extract_strided_slice %486 {offsets = [0, 14], sizes = [8, 1], strides = [1, 1]} : vector<8x128xi1> to vector<8x1xi1>
    %c14_i32 = arith.constant 14 : i32
    %513 = vector.broadcast %c14_i32 : i32 to vector<8x128xi32>
    %514 = arith.cmpi sgt, %24, %513 : vector<8x128xi32>
    %515 = arith.andi %511, %514 : vector<8x128xi1>
    %516 = vector.broadcast %512 : vector<8x1xi1> to vector<8x128xi1>
    %517 = arith.andi %515, %516 : vector<8x128xi1>
    %cst_72 = arith.constant dense<true> : vector<8x128xi1>
    %518 = arith.xori %517, %cst_72 : vector<8x128xi1>
    %519 = arith.andi %486, %518 : vector<8x128xi1>
    %520 = vector.extract_strided_slice %1 {offsets = [0, 15], sizes = [8, 1], strides = [1, 1]} : vector<8x128xf32> to vector<8x1xf32>
    %521 = vector.extract_strided_slice %3 {offsets = [0, 15], sizes = [8, 1], strides = [1, 1]} : vector<8x128xf32> to vector<8x1xf32>
    %522 = vector.extract_strided_slice %5 {offsets = [0, 15], sizes = [8, 1], strides = [1, 1]} : vector<8x128xf32> to vector<8x1xf32>
    %523 = vector.extract_strided_slice %7 {offsets = [0, 15], sizes = [8, 1], strides = [1, 1]} : vector<8x128xf32> to vector<8x1xf32>
    %524 = vector.extract_strided_slice %23 {offsets = [0, 15], sizes = [8, 1], strides = [1, 1]} : vector<8x128xf32> to vector<8x1xf32>
    %525 = vector.broadcast %522 : vector<8x1xf32> to vector<8x128xf32>
    %526 = arith.minimumf %525, %5 : vector<8x128xf32>
    %527 = vector.broadcast %520 : vector<8x1xf32> to vector<8x128xf32>
    %528 = arith.maximumf %527, %1 : vector<8x128xf32>
    %529 = arith.subf %526, %528 : vector<8x128xf32>
    %cst_73 = arith.constant 0.000000e+00 : f32
    %530 = vector.broadcast %cst_73 : f32 to vector<8x128xf32>
    %531 = arith.maximumf %529, %530 : vector<8x128xf32>
    %532 = vector.broadcast %523 : vector<8x1xf32> to vector<8x128xf32>
    %533 = arith.minimumf %532, %7 : vector<8x128xf32>
    %534 = vector.broadcast %521 : vector<8x1xf32> to vector<8x128xf32>
    %535 = arith.maximumf %534, %3 : vector<8x128xf32>
    %536 = arith.subf %533, %535 : vector<8x128xf32>
    %cst_74 = arith.constant 0.000000e+00 : f32
    %537 = vector.broadcast %cst_74 : f32 to vector<8x128xf32>
    %538 = arith.maximumf %536, %537 : vector<8x128xf32>
    %539 = arith.mulf %531, %538 : vector<8x128xf32>
    %cst_75 = arith.constant 1.500000e+00 : f32
    %540 = vector.broadcast %cst_75 : f32 to vector<8x128xf32>
    %541 = arith.mulf %539, %540 : vector<8x128xf32>
    %542 = vector.broadcast %524 : vector<8x1xf32> to vector<8x128xf32>
    %543 = arith.addf %542, %23 : vector<8x128xf32>
    %544 = arith.cmpf ogt, %541, %543 : vector<8x128xf32>
    %545 = vector.extract_strided_slice %519 {offsets = [0, 15], sizes = [8, 1], strides = [1, 1]} : vector<8x128xi1> to vector<8x1xi1>
    %c15_i32 = arith.constant 15 : i32
    %546 = vector.broadcast %c15_i32 : i32 to vector<8x128xi32>
    %547 = arith.cmpi sgt, %24, %546 : vector<8x128xi32>
    %548 = arith.andi %544, %547 : vector<8x128xi1>
    %549 = vector.broadcast %545 : vector<8x1xi1> to vector<8x128xi1>
    %550 = arith.andi %548, %549 : vector<8x128xi1>
    %cst_76 = arith.constant dense<true> : vector<8x128xi1>
    %551 = arith.xori %550, %cst_76 : vector<8x128xi1>
    %552 = arith.andi %519, %551 : vector<8x128xi1>
    %553 = vector.extract_strided_slice %1 {offsets = [0, 16], sizes = [8, 1], strides = [1, 1]} : vector<8x128xf32> to vector<8x1xf32>
    %554 = vector.extract_strided_slice %3 {offsets = [0, 16], sizes = [8, 1], strides = [1, 1]} : vector<8x128xf32> to vector<8x1xf32>
    %555 = vector.extract_strided_slice %5 {offsets = [0, 16], sizes = [8, 1], strides = [1, 1]} : vector<8x128xf32> to vector<8x1xf32>
    %556 = vector.extract_strided_slice %7 {offsets = [0, 16], sizes = [8, 1], strides = [1, 1]} : vector<8x128xf32> to vector<8x1xf32>
    %557 = vector.extract_strided_slice %23 {offsets = [0, 16], sizes = [8, 1], strides = [1, 1]} : vector<8x128xf32> to vector<8x1xf32>
    %558 = vector.broadcast %555 : vector<8x1xf32> to vector<8x128xf32>
    %559 = arith.minimumf %558, %5 : vector<8x128xf32>
    %560 = vector.broadcast %553 : vector<8x1xf32> to vector<8x128xf32>
    %561 = arith.maximumf %560, %1 : vector<8x128xf32>
    %562 = arith.subf %559, %561 : vector<8x128xf32>
    %cst_77 = arith.constant 0.000000e+00 : f32
    %563 = vector.broadcast %cst_77 : f32 to vector<8x128xf32>
    %564 = arith.maximumf %562, %563 : vector<8x128xf32>
    %565 = vector.broadcast %556 : vector<8x1xf32> to vector<8x128xf32>
    %566 = arith.minimumf %565, %7 : vector<8x128xf32>
    %567 = vector.broadcast %554 : vector<8x1xf32> to vector<8x128xf32>
    %568 = arith.maximumf %567, %3 : vector<8x128xf32>
    %569 = arith.subf %566, %568 : vector<8x128xf32>
    %cst_78 = arith.constant 0.000000e+00 : f32
    %570 = vector.broadcast %cst_78 : f32 to vector<8x128xf32>
    %571 = arith.maximumf %569, %570 : vector<8x128xf32>
    %572 = arith.mulf %564, %571 : vector<8x128xf32>
    %cst_79 = arith.constant 1.500000e+00 : f32
    %573 = vector.broadcast %cst_79 : f32 to vector<8x128xf32>
    %574 = arith.mulf %572, %573 : vector<8x128xf32>
    %575 = vector.broadcast %557 : vector<8x1xf32> to vector<8x128xf32>
    %576 = arith.addf %575, %23 : vector<8x128xf32>
    %577 = arith.cmpf ogt, %574, %576 : vector<8x128xf32>
    %578 = vector.extract_strided_slice %552 {offsets = [0, 16], sizes = [8, 1], strides = [1, 1]} : vector<8x128xi1> to vector<8x1xi1>
    %c16_i32 = arith.constant 16 : i32
    %579 = vector.broadcast %c16_i32 : i32 to vector<8x128xi32>
    %580 = arith.cmpi sgt, %24, %579 : vector<8x128xi32>
    %581 = arith.andi %577, %580 : vector<8x128xi1>
    %582 = vector.broadcast %578 : vector<8x1xi1> to vector<8x128xi1>
    %583 = arith.andi %581, %582 : vector<8x128xi1>
    %cst_80 = arith.constant dense<true> : vector<8x128xi1>
    %584 = arith.xori %583, %cst_80 : vector<8x128xi1>
    %585 = arith.andi %552, %584 : vector<8x128xi1>
    %586 = vector.extract_strided_slice %1 {offsets = [0, 17], sizes = [8, 1], strides = [1, 1]} : vector<8x128xf32> to vector<8x1xf32>
    %587 = vector.extract_strided_slice %3 {offsets = [0, 17], sizes = [8, 1], strides = [1, 1]} : vector<8x128xf32> to vector<8x1xf32>
    %588 = vector.extract_strided_slice %5 {offsets = [0, 17], sizes = [8, 1], strides = [1, 1]} : vector<8x128xf32> to vector<8x1xf32>
    %589 = vector.extract_strided_slice %7 {offsets = [0, 17], sizes = [8, 1], strides = [1, 1]} : vector<8x128xf32> to vector<8x1xf32>
    %590 = vector.extract_strided_slice %23 {offsets = [0, 17], sizes = [8, 1], strides = [1, 1]} : vector<8x128xf32> to vector<8x1xf32>
    %591 = vector.broadcast %588 : vector<8x1xf32> to vector<8x128xf32>
    %592 = arith.minimumf %591, %5 : vector<8x128xf32>
    %593 = vector.broadcast %586 : vector<8x1xf32> to vector<8x128xf32>
    %594 = arith.maximumf %593, %1 : vector<8x128xf32>
    %595 = arith.subf %592, %594 : vector<8x128xf32>
    %cst_81 = arith.constant 0.000000e+00 : f32
    %596 = vector.broadcast %cst_81 : f32 to vector<8x128xf32>
    %597 = arith.maximumf %595, %596 : vector<8x128xf32>
    %598 = vector.broadcast %589 : vector<8x1xf32> to vector<8x128xf32>
    %599 = arith.minimumf %598, %7 : vector<8x128xf32>
    %600 = vector.broadcast %587 : vector<8x1xf32> to vector<8x128xf32>
    %601 = arith.maximumf %600, %3 : vector<8x128xf32>
    %602 = arith.subf %599, %601 : vector<8x128xf32>
    %cst_82 = arith.constant 0.000000e+00 : f32
    %603 = vector.broadcast %cst_82 : f32 to vector<8x128xf32>
    %604 = arith.maximumf %602, %603 : vector<8x128xf32>
    %605 = arith.mulf %597, %604 : vector<8x128xf32>
    %cst_83 = arith.constant 1.500000e+00 : f32
    %606 = vector.broadcast %cst_83 : f32 to vector<8x128xf32>
    %607 = arith.mulf %605, %606 : vector<8x128xf32>
    %608 = vector.broadcast %590 : vector<8x1xf32> to vector<8x128xf32>
    %609 = arith.addf %608, %23 : vector<8x128xf32>
    %610 = arith.cmpf ogt, %607, %609 : vector<8x128xf32>
    %611 = vector.extract_strided_slice %585 {offsets = [0, 17], sizes = [8, 1], strides = [1, 1]} : vector<8x128xi1> to vector<8x1xi1>
    %c17_i32 = arith.constant 17 : i32
    %612 = vector.broadcast %c17_i32 : i32 to vector<8x128xi32>
    %613 = arith.cmpi sgt, %24, %612 : vector<8x128xi32>
    %614 = arith.andi %610, %613 : vector<8x128xi1>
    %615 = vector.broadcast %611 : vector<8x1xi1> to vector<8x128xi1>
    %616 = arith.andi %614, %615 : vector<8x128xi1>
    %cst_84 = arith.constant dense<true> : vector<8x128xi1>
    %617 = arith.xori %616, %cst_84 : vector<8x128xi1>
    %618 = arith.andi %585, %617 : vector<8x128xi1>
    %619 = vector.extract_strided_slice %1 {offsets = [0, 18], sizes = [8, 1], strides = [1, 1]} : vector<8x128xf32> to vector<8x1xf32>
    %620 = vector.extract_strided_slice %3 {offsets = [0, 18], sizes = [8, 1], strides = [1, 1]} : vector<8x128xf32> to vector<8x1xf32>
    %621 = vector.extract_strided_slice %5 {offsets = [0, 18], sizes = [8, 1], strides = [1, 1]} : vector<8x128xf32> to vector<8x1xf32>
    %622 = vector.extract_strided_slice %7 {offsets = [0, 18], sizes = [8, 1], strides = [1, 1]} : vector<8x128xf32> to vector<8x1xf32>
    %623 = vector.extract_strided_slice %23 {offsets = [0, 18], sizes = [8, 1], strides = [1, 1]} : vector<8x128xf32> to vector<8x1xf32>
    %624 = vector.broadcast %621 : vector<8x1xf32> to vector<8x128xf32>
    %625 = arith.minimumf %624, %5 : vector<8x128xf32>
    %626 = vector.broadcast %619 : vector<8x1xf32> to vector<8x128xf32>
    %627 = arith.maximumf %626, %1 : vector<8x128xf32>
    %628 = arith.subf %625, %627 : vector<8x128xf32>
    %cst_85 = arith.constant 0.000000e+00 : f32
    %629 = vector.broadcast %cst_85 : f32 to vector<8x128xf32>
    %630 = arith.maximumf %628, %629 : vector<8x128xf32>
    %631 = vector.broadcast %622 : vector<8x1xf32> to vector<8x128xf32>
    %632 = arith.minimumf %631, %7 : vector<8x128xf32>
    %633 = vector.broadcast %620 : vector<8x1xf32> to vector<8x128xf32>
    %634 = arith.maximumf %633, %3 : vector<8x128xf32>
    %635 = arith.subf %632, %634 : vector<8x128xf32>
    %cst_86 = arith.constant 0.000000e+00 : f32
    %636 = vector.broadcast %cst_86 : f32 to vector<8x128xf32>
    %637 = arith.maximumf %635, %636 : vector<8x128xf32>
    %638 = arith.mulf %630, %637 : vector<8x128xf32>
    %cst_87 = arith.constant 1.500000e+00 : f32
    %639 = vector.broadcast %cst_87 : f32 to vector<8x128xf32>
    %640 = arith.mulf %638, %639 : vector<8x128xf32>
    %641 = vector.broadcast %623 : vector<8x1xf32> to vector<8x128xf32>
    %642 = arith.addf %641, %23 : vector<8x128xf32>
    %643 = arith.cmpf ogt, %640, %642 : vector<8x128xf32>
    %644 = vector.extract_strided_slice %618 {offsets = [0, 18], sizes = [8, 1], strides = [1, 1]} : vector<8x128xi1> to vector<8x1xi1>
    %c18_i32 = arith.constant 18 : i32
    %645 = vector.broadcast %c18_i32 : i32 to vector<8x128xi32>
    %646 = arith.cmpi sgt, %24, %645 : vector<8x128xi32>
    %647 = arith.andi %643, %646 : vector<8x128xi1>
    %648 = vector.broadcast %644 : vector<8x1xi1> to vector<8x128xi1>
    %649 = arith.andi %647, %648 : vector<8x128xi1>
    %cst_88 = arith.constant dense<true> : vector<8x128xi1>
    %650 = arith.xori %649, %cst_88 : vector<8x128xi1>
    %651 = arith.andi %618, %650 : vector<8x128xi1>
    %652 = vector.extract_strided_slice %1 {offsets = [0, 19], sizes = [8, 1], strides = [1, 1]} : vector<8x128xf32> to vector<8x1xf32>
    %653 = vector.extract_strided_slice %3 {offsets = [0, 19], sizes = [8, 1], strides = [1, 1]} : vector<8x128xf32> to vector<8x1xf32>
    %654 = vector.extract_strided_slice %5 {offsets = [0, 19], sizes = [8, 1], strides = [1, 1]} : vector<8x128xf32> to vector<8x1xf32>
    %655 = vector.extract_strided_slice %7 {offsets = [0, 19], sizes = [8, 1], strides = [1, 1]} : vector<8x128xf32> to vector<8x1xf32>
    %656 = vector.extract_strided_slice %23 {offsets = [0, 19], sizes = [8, 1], strides = [1, 1]} : vector<8x128xf32> to vector<8x1xf32>
    %657 = vector.broadcast %654 : vector<8x1xf32> to vector<8x128xf32>
    %658 = arith.minimumf %657, %5 : vector<8x128xf32>
    %659 = vector.broadcast %652 : vector<8x1xf32> to vector<8x128xf32>
    %660 = arith.maximumf %659, %1 : vector<8x128xf32>
    %661 = arith.subf %658, %660 : vector<8x128xf32>
    %cst_89 = arith.constant 0.000000e+00 : f32
    %662 = vector.broadcast %cst_89 : f32 to vector<8x128xf32>
    %663 = arith.maximumf %661, %662 : vector<8x128xf32>
    %664 = vector.broadcast %655 : vector<8x1xf32> to vector<8x128xf32>
    %665 = arith.minimumf %664, %7 : vector<8x128xf32>
    %666 = vector.broadcast %653 : vector<8x1xf32> to vector<8x128xf32>
    %667 = arith.maximumf %666, %3 : vector<8x128xf32>
    %668 = arith.subf %665, %667 : vector<8x128xf32>
    %cst_90 = arith.constant 0.000000e+00 : f32
    %669 = vector.broadcast %cst_90 : f32 to vector<8x128xf32>
    %670 = arith.maximumf %668, %669 : vector<8x128xf32>
    %671 = arith.mulf %663, %670 : vector<8x128xf32>
    %cst_91 = arith.constant 1.500000e+00 : f32
    %672 = vector.broadcast %cst_91 : f32 to vector<8x128xf32>
    %673 = arith.mulf %671, %672 : vector<8x128xf32>
    %674 = vector.broadcast %656 : vector<8x1xf32> to vector<8x128xf32>
    %675 = arith.addf %674, %23 : vector<8x128xf32>
    %676 = arith.cmpf ogt, %673, %675 : vector<8x128xf32>
    %677 = vector.extract_strided_slice %651 {offsets = [0, 19], sizes = [8, 1], strides = [1, 1]} : vector<8x128xi1> to vector<8x1xi1>
    %c19_i32 = arith.constant 19 : i32
    %678 = vector.broadcast %c19_i32 : i32 to vector<8x128xi32>
    %679 = arith.cmpi sgt, %24, %678 : vector<8x128xi32>
    %680 = arith.andi %676, %679 : vector<8x128xi1>
    %681 = vector.broadcast %677 : vector<8x1xi1> to vector<8x128xi1>
    %682 = arith.andi %680, %681 : vector<8x128xi1>
    %cst_92 = arith.constant dense<true> : vector<8x128xi1>
    %683 = arith.xori %682, %cst_92 : vector<8x128xi1>
    %684 = arith.andi %651, %683 : vector<8x128xi1>
    %685 = vector.extract_strided_slice %1 {offsets = [0, 20], sizes = [8, 1], strides = [1, 1]} : vector<8x128xf32> to vector<8x1xf32>
    %686 = vector.extract_strided_slice %3 {offsets = [0, 20], sizes = [8, 1], strides = [1, 1]} : vector<8x128xf32> to vector<8x1xf32>
    %687 = vector.extract_strided_slice %5 {offsets = [0, 20], sizes = [8, 1], strides = [1, 1]} : vector<8x128xf32> to vector<8x1xf32>
    %688 = vector.extract_strided_slice %7 {offsets = [0, 20], sizes = [8, 1], strides = [1, 1]} : vector<8x128xf32> to vector<8x1xf32>
    %689 = vector.extract_strided_slice %23 {offsets = [0, 20], sizes = [8, 1], strides = [1, 1]} : vector<8x128xf32> to vector<8x1xf32>
    %690 = vector.broadcast %687 : vector<8x1xf32> to vector<8x128xf32>
    %691 = arith.minimumf %690, %5 : vector<8x128xf32>
    %692 = vector.broadcast %685 : vector<8x1xf32> to vector<8x128xf32>
    %693 = arith.maximumf %692, %1 : vector<8x128xf32>
    %694 = arith.subf %691, %693 : vector<8x128xf32>
    %cst_93 = arith.constant 0.000000e+00 : f32
    %695 = vector.broadcast %cst_93 : f32 to vector<8x128xf32>
    %696 = arith.maximumf %694, %695 : vector<8x128xf32>
    %697 = vector.broadcast %688 : vector<8x1xf32> to vector<8x128xf32>
    %698 = arith.minimumf %697, %7 : vector<8x128xf32>
    %699 = vector.broadcast %686 : vector<8x1xf32> to vector<8x128xf32>
    %700 = arith.maximumf %699, %3 : vector<8x128xf32>
    %701 = arith.subf %698, %700 : vector<8x128xf32>
    %cst_94 = arith.constant 0.000000e+00 : f32
    %702 = vector.broadcast %cst_94 : f32 to vector<8x128xf32>
    %703 = arith.maximumf %701, %702 : vector<8x128xf32>
    %704 = arith.mulf %696, %703 : vector<8x128xf32>
    %cst_95 = arith.constant 1.500000e+00 : f32
    %705 = vector.broadcast %cst_95 : f32 to vector<8x128xf32>
    %706 = arith.mulf %704, %705 : vector<8x128xf32>
    %707 = vector.broadcast %689 : vector<8x1xf32> to vector<8x128xf32>
    %708 = arith.addf %707, %23 : vector<8x128xf32>
    %709 = arith.cmpf ogt, %706, %708 : vector<8x128xf32>
    %710 = vector.extract_strided_slice %684 {offsets = [0, 20], sizes = [8, 1], strides = [1, 1]} : vector<8x128xi1> to vector<8x1xi1>
    %c20_i32 = arith.constant 20 : i32
    %711 = vector.broadcast %c20_i32 : i32 to vector<8x128xi32>
    %712 = arith.cmpi sgt, %24, %711 : vector<8x128xi32>
    %713 = arith.andi %709, %712 : vector<8x128xi1>
    %714 = vector.broadcast %710 : vector<8x1xi1> to vector<8x128xi1>
    %715 = arith.andi %713, %714 : vector<8x128xi1>
    %cst_96 = arith.constant dense<true> : vector<8x128xi1>
    %716 = arith.xori %715, %cst_96 : vector<8x128xi1>
    %717 = arith.andi %684, %716 : vector<8x128xi1>
    %718 = vector.extract_strided_slice %1 {offsets = [0, 21], sizes = [8, 1], strides = [1, 1]} : vector<8x128xf32> to vector<8x1xf32>
    %719 = vector.extract_strided_slice %3 {offsets = [0, 21], sizes = [8, 1], strides = [1, 1]} : vector<8x128xf32> to vector<8x1xf32>
    %720 = vector.extract_strided_slice %5 {offsets = [0, 21], sizes = [8, 1], strides = [1, 1]} : vector<8x128xf32> to vector<8x1xf32>
    %721 = vector.extract_strided_slice %7 {offsets = [0, 21], sizes = [8, 1], strides = [1, 1]} : vector<8x128xf32> to vector<8x1xf32>
    %722 = vector.extract_strided_slice %23 {offsets = [0, 21], sizes = [8, 1], strides = [1, 1]} : vector<8x128xf32> to vector<8x1xf32>
    %723 = vector.broadcast %720 : vector<8x1xf32> to vector<8x128xf32>
    %724 = arith.minimumf %723, %5 : vector<8x128xf32>
    %725 = vector.broadcast %718 : vector<8x1xf32> to vector<8x128xf32>
    %726 = arith.maximumf %725, %1 : vector<8x128xf32>
    %727 = arith.subf %724, %726 : vector<8x128xf32>
    %cst_97 = arith.constant 0.000000e+00 : f32
    %728 = vector.broadcast %cst_97 : f32 to vector<8x128xf32>
    %729 = arith.maximumf %727, %728 : vector<8x128xf32>
    %730 = vector.broadcast %721 : vector<8x1xf32> to vector<8x128xf32>
    %731 = arith.minimumf %730, %7 : vector<8x128xf32>
    %732 = vector.broadcast %719 : vector<8x1xf32> to vector<8x128xf32>
    %733 = arith.maximumf %732, %3 : vector<8x128xf32>
    %734 = arith.subf %731, %733 : vector<8x128xf32>
    %cst_98 = arith.constant 0.000000e+00 : f32
    %735 = vector.broadcast %cst_98 : f32 to vector<8x128xf32>
    %736 = arith.maximumf %734, %735 : vector<8x128xf32>
    %737 = arith.mulf %729, %736 : vector<8x128xf32>
    %cst_99 = arith.constant 1.500000e+00 : f32
    %738 = vector.broadcast %cst_99 : f32 to vector<8x128xf32>
    %739 = arith.mulf %737, %738 : vector<8x128xf32>
    %740 = vector.broadcast %722 : vector<8x1xf32> to vector<8x128xf32>
    %741 = arith.addf %740, %23 : vector<8x128xf32>
    %742 = arith.cmpf ogt, %739, %741 : vector<8x128xf32>
    %743 = vector.extract_strided_slice %717 {offsets = [0, 21], sizes = [8, 1], strides = [1, 1]} : vector<8x128xi1> to vector<8x1xi1>
    %c21_i32 = arith.constant 21 : i32
    %744 = vector.broadcast %c21_i32 : i32 to vector<8x128xi32>
    %745 = arith.cmpi sgt, %24, %744 : vector<8x128xi32>
    %746 = arith.andi %742, %745 : vector<8x128xi1>
    %747 = vector.broadcast %743 : vector<8x1xi1> to vector<8x128xi1>
    %748 = arith.andi %746, %747 : vector<8x128xi1>
    %cst_100 = arith.constant dense<true> : vector<8x128xi1>
    %749 = arith.xori %748, %cst_100 : vector<8x128xi1>
    %750 = arith.andi %717, %749 : vector<8x128xi1>
    %751 = vector.extract_strided_slice %1 {offsets = [0, 22], sizes = [8, 1], strides = [1, 1]} : vector<8x128xf32> to vector<8x1xf32>
    %752 = vector.extract_strided_slice %3 {offsets = [0, 22], sizes = [8, 1], strides = [1, 1]} : vector<8x128xf32> to vector<8x1xf32>
    %753 = vector.extract_strided_slice %5 {offsets = [0, 22], sizes = [8, 1], strides = [1, 1]} : vector<8x128xf32> to vector<8x1xf32>
    %754 = vector.extract_strided_slice %7 {offsets = [0, 22], sizes = [8, 1], strides = [1, 1]} : vector<8x128xf32> to vector<8x1xf32>
    %755 = vector.extract_strided_slice %23 {offsets = [0, 22], sizes = [8, 1], strides = [1, 1]} : vector<8x128xf32> to vector<8x1xf32>
    %756 = vector.broadcast %753 : vector<8x1xf32> to vector<8x128xf32>
    %757 = arith.minimumf %756, %5 : vector<8x128xf32>
    %758 = vector.broadcast %751 : vector<8x1xf32> to vector<8x128xf32>
    %759 = arith.maximumf %758, %1 : vector<8x128xf32>
    %760 = arith.subf %757, %759 : vector<8x128xf32>
    %cst_101 = arith.constant 0.000000e+00 : f32
    %761 = vector.broadcast %cst_101 : f32 to vector<8x128xf32>
    %762 = arith.maximumf %760, %761 : vector<8x128xf32>
    %763 = vector.broadcast %754 : vector<8x1xf32> to vector<8x128xf32>
    %764 = arith.minimumf %763, %7 : vector<8x128xf32>
    %765 = vector.broadcast %752 : vector<8x1xf32> to vector<8x128xf32>
    %766 = arith.maximumf %765, %3 : vector<8x128xf32>
    %767 = arith.subf %764, %766 : vector<8x128xf32>
    %cst_102 = arith.constant 0.000000e+00 : f32
    %768 = vector.broadcast %cst_102 : f32 to vector<8x128xf32>
    %769 = arith.maximumf %767, %768 : vector<8x128xf32>
    %770 = arith.mulf %762, %769 : vector<8x128xf32>
    %cst_103 = arith.constant 1.500000e+00 : f32
    %771 = vector.broadcast %cst_103 : f32 to vector<8x128xf32>
    %772 = arith.mulf %770, %771 : vector<8x128xf32>
    %773 = vector.broadcast %755 : vector<8x1xf32> to vector<8x128xf32>
    %774 = arith.addf %773, %23 : vector<8x128xf32>
    %775 = arith.cmpf ogt, %772, %774 : vector<8x128xf32>
    %776 = vector.extract_strided_slice %750 {offsets = [0, 22], sizes = [8, 1], strides = [1, 1]} : vector<8x128xi1> to vector<8x1xi1>
    %c22_i32 = arith.constant 22 : i32
    %777 = vector.broadcast %c22_i32 : i32 to vector<8x128xi32>
    %778 = arith.cmpi sgt, %24, %777 : vector<8x128xi32>
    %779 = arith.andi %775, %778 : vector<8x128xi1>
    %780 = vector.broadcast %776 : vector<8x1xi1> to vector<8x128xi1>
    %781 = arith.andi %779, %780 : vector<8x128xi1>
    %cst_104 = arith.constant dense<true> : vector<8x128xi1>
    %782 = arith.xori %781, %cst_104 : vector<8x128xi1>
    %783 = arith.andi %750, %782 : vector<8x128xi1>
    %784 = vector.extract_strided_slice %1 {offsets = [0, 23], sizes = [8, 1], strides = [1, 1]} : vector<8x128xf32> to vector<8x1xf32>
    %785 = vector.extract_strided_slice %3 {offsets = [0, 23], sizes = [8, 1], strides = [1, 1]} : vector<8x128xf32> to vector<8x1xf32>
    %786 = vector.extract_strided_slice %5 {offsets = [0, 23], sizes = [8, 1], strides = [1, 1]} : vector<8x128xf32> to vector<8x1xf32>
    %787 = vector.extract_strided_slice %7 {offsets = [0, 23], sizes = [8, 1], strides = [1, 1]} : vector<8x128xf32> to vector<8x1xf32>
    %788 = vector.extract_strided_slice %23 {offsets = [0, 23], sizes = [8, 1], strides = [1, 1]} : vector<8x128xf32> to vector<8x1xf32>
    %789 = vector.broadcast %786 : vector<8x1xf32> to vector<8x128xf32>
    %790 = arith.minimumf %789, %5 : vector<8x128xf32>
    %791 = vector.broadcast %784 : vector<8x1xf32> to vector<8x128xf32>
    %792 = arith.maximumf %791, %1 : vector<8x128xf32>
    %793 = arith.subf %790, %792 : vector<8x128xf32>
    %cst_105 = arith.constant 0.000000e+00 : f32
    %794 = vector.broadcast %cst_105 : f32 to vector<8x128xf32>
    %795 = arith.maximumf %793, %794 : vector<8x128xf32>
    %796 = vector.broadcast %787 : vector<8x1xf32> to vector<8x128xf32>
    %797 = arith.minimumf %796, %7 : vector<8x128xf32>
    %798 = vector.broadcast %785 : vector<8x1xf32> to vector<8x128xf32>
    %799 = arith.maximumf %798, %3 : vector<8x128xf32>
    %800 = arith.subf %797, %799 : vector<8x128xf32>
    %cst_106 = arith.constant 0.000000e+00 : f32
    %801 = vector.broadcast %cst_106 : f32 to vector<8x128xf32>
    %802 = arith.maximumf %800, %801 : vector<8x128xf32>
    %803 = arith.mulf %795, %802 : vector<8x128xf32>
    %cst_107 = arith.constant 1.500000e+00 : f32
    %804 = vector.broadcast %cst_107 : f32 to vector<8x128xf32>
    %805 = arith.mulf %803, %804 : vector<8x128xf32>
    %806 = vector.broadcast %788 : vector<8x1xf32> to vector<8x128xf32>
    %807 = arith.addf %806, %23 : vector<8x128xf32>
    %808 = arith.cmpf ogt, %805, %807 : vector<8x128xf32>
    %809 = vector.extract_strided_slice %783 {offsets = [0, 23], sizes = [8, 1], strides = [1, 1]} : vector<8x128xi1> to vector<8x1xi1>
    %c23_i32 = arith.constant 23 : i32
    %810 = vector.broadcast %c23_i32 : i32 to vector<8x128xi32>
    %811 = arith.cmpi sgt, %24, %810 : vector<8x128xi32>
    %812 = arith.andi %808, %811 : vector<8x128xi1>
    %813 = vector.broadcast %809 : vector<8x1xi1> to vector<8x128xi1>
    %814 = arith.andi %812, %813 : vector<8x128xi1>
    %cst_108 = arith.constant dense<true> : vector<8x128xi1>
    %815 = arith.xori %814, %cst_108 : vector<8x128xi1>
    %816 = arith.andi %783, %815 : vector<8x128xi1>
    %cst_109 = arith.constant -1.000000e+30 : f32
    %817 = vector.broadcast %cst_109 : f32 to vector<8x128xf32>
    %818 = arith.select %816, %8, %817 : vector<8x128xi1>, vector<8x128xf32>
    %c0_110 = arith.constant 0 : index
    %c0_111 = arith.constant 0 : index
    %819 = vector.load %arg3[%c0_110, %c0_111] : memref<8x128xf32, #tpu.memory_space<vmem>>, vector<8x128xf32>
    tpu.vector_store %arg3[%c0_110, %c0_111], %818 {strides = array<i32>} : memref<8x128xf32, #tpu.memory_space<vmem>>, vector<8x128xf32>,
    return
  }
  func.func @transform_0(%arg0: i32) -> (i32, i32, i32) {
    %c0_i32 = arith.constant 0 : i32
    %c0_i32_0 = arith.constant 0 : i32
    %c0_i32_1 = arith.constant 0 : i32
    return %c0_i32, %arg0, %c0_i32_0 : i32, i32, i32
  }
  func.func @transform_1(%arg0: i32) -> (i32, i32) {
    %c0_i32 = arith.constant 0 : i32
    %c0_i32_0 = arith.constant 0 : i32
    return %arg0, %c0_i32 : i32, i32
  }
  func.func @transform_2(%arg0: i32) -> (i32, i32) {
    %c0_i32 = arith.constant 0 : i32
    %c0_i32_0 = arith.constant 0 : i32
    return %arg0, %c0_i32 : i32, i32
  }
}

</mosaic_0001>

<llo_original>
// kernel: tpu_custom_call.1
$region0: #{tpu_custom_call.1}
  #allocation0 [shape = 'u32[]', space=smem, size = 0x4, offset = 0x4, fixed_abs, tag = 'smem constant byte address 0x4 - core index']
  #allocation1 [shape = 'u32[144,128]{1,0:T(1,128)}', space=vmem, size = 0x12000, scoped, tag = 'internal scratch']
  %s0 = inlined_call_operand.hbm [shape: f32[4,8,128], index: 0, kind: input, shape index: {}]
  %s1 = inlined_call_operand.hbm [shape: f32[8,128], index: 1, kind: input, shape index: {}]
  %s2 = inlined_call_operand.hbm [shape: f32[8,128], index: 2, kind: output, shape index: {}]
  %s3 = sld [smem:[#allocation0]]
  $region26: #{tpu_custom_call.1} parent=0
    _
  %s5 = ssub.s32 1, %s3
  %s6 = scalar_select 0, %s5, %s3
  $region1: #{tpu_custom_call.1} parent=0
    #allocation2 [shape = 'u8[16384]{0}', space=vmem, size = 0x4000, scoped, tag = 'input window, operand 0, single buffered']
    #allocation3 [shape = 's32[1]{0}', space=sflag, size = 0x4, scoped, tag = 'scoped memory for tpu_custom_call.1']
    #allocation4 [shape = 's32[1]{0}', space=sflag, size = 0x4, scoped, tag = 'scoped memory for tpu_custom_call.1']
    #allocation5 [shape = 'u8[4096]{0}', space=vmem, size = 0x1000, scoped, tag = 'input window, operand 1, single buffered']
    #allocation6 [shape = 's32[1]{0}', space=sflag, size = 0x4, scoped, tag = 'scoped memory for tpu_custom_call.1']
    #allocation7 [shape = 'u8[4096]{0}', space=vmem, size = 0x1000, scoped, tag = 'output window, operand 0, single buffered']
    %7 = vsyncpa [#allocation3], 0
    %8 = vsyncpa [#allocation6], 0
    %9 = vsyncpa [#allocation4], 0
    // Predicated region
    $region2: #{tpu_custom_call.1} parent=1 // pred_check
      _
    $region3: #{tpu_custom_call.1} parent=1 // pred_check_branch
      %11 = sbr.rel (0) target = $region5
    $region4: #{tpu_custom_call.1} parent=1 // pred_region
      %s13 = ssub.s32 512, 512
      %14 = vsyncadd [#allocation3], %s13
      %s15 = sshll.u32 [#allocation2], 4
      %s16 = int_to_ptr.vmem [resolvable:$true] %s15
      %21 = dma.hbm_to_vmem [thread:$0]  %s0, 512, %s16, [#allocation3], 128, 128, 8
    $region5: #{tpu_custom_call.1} parent=1 // pred_fallthru
      _
    // Predicated region
    $region6: #{tpu_custom_call.1} parent=1 // pred_check
      _
    $region7: #{tpu_custom_call.1} parent=1 // pred_check_branch
      %23 = sbr.rel (0) target = $region9
    $region8: #{tpu_custom_call.1} parent=1 // pred_region
      %s25 = ssub.s32 128, 128
      %26 = vsyncadd [#allocation6], %s25
      %s28 = sshll.u32 [#allocation5], 4
      %s29 = int_to_ptr.vmem [resolvable:$true] %s28
      %31 = dma.hbm_to_vmem [thread:$0]  %s1, 128, %s29, [#allocation6]
    $region9: #{tpu_custom_call.1} parent=1 // pred_fallthru
      _
    // Predicated region
    $region10: #{tpu_custom_call.1} parent=1 // pred_check
      _
    $region11: #{tpu_custom_call.1} parent=1 // pred_check_branch
      %33 = sbr.rel (0) target = $region13
    $region12: #{tpu_custom_call.1} parent=1 // pred_region
      %34 = dma.done [#allocation3], 512
    $region13: #{tpu_custom_call.1} parent=1 // pred_fallthru
      _
    // Predicated region
    $region14: #{tpu_custom_call.1} parent=1 // pred_check
      _
    $region15: #{tpu_custom_call.1} parent=1 // pred_check_branch
      %36 = sbr.rel (0) target = $region17
    $region16: #{tpu_custom_call.1} parent=1 // pred_region
      %37 = dma.done [#allocation6], 128
    $region17: #{tpu_custom_call.1} parent=1 // pred_fallthru
      _
    %v38 = vld [vmem:[#allocation2] sm:$0xff]
    %s39 = scalar_lea.vmem [#allocation2], 8
    %v40 = vld [vmem:[%s39] sm:$0xff]
    %s41 = scalar_lea.vmem [#allocation2], 16
    %v42 = vld [vmem:[%s41] sm:$0xff]
    %s43 = scalar_lea.vmem [#allocation2], 24
    %v44 = vld [vmem:[%s43] sm:$0xff]
    %v45 = vld [vmem:[#allocation5] sm:$0xff]
    %vm46 = vcmp.gt.f32.partialorder %v45, 0.05
    %vm47 = vcmp.gt.f32.partialorder %v42, %v38
    %vm48 = vmand %vm46, %vm47
    %vm49 = vcmp.gt.f32.partialorder %v44, %v40
    %vm50 = vmand %vm48, %vm49
    %v51 = vsub.f32 %v42, %v38
    %v52 = vmax.f32 %v51, 0.0
    %v53 = vsub.f32 %v44, %v40
    %v54 = vmax.f32 %v53, 0.0
    %v55 = vmul.f32 %v52, %v54
    %v56 = vmul.f32 %v55, 0.5
    %v57 = vlaneseq
    %v58 = vand.u32 %v57, 127
    %60 = vset.pattern.permute.xlu0 0
    %61 = vperm.xlu0 %60, %v42
    %v62 = vpop.permute.xlu0 %61
    %v64 = vmin.f32 %v62, %v42
    %66 = vset.pattern.permute.xlu0 0
    %67 = vperm.xlu0 %66, %v38
    %v68 = vpop.permute.xlu0 %67
    %v70 = vmax.f32 %v68, %v38
    %v71 = vsub.f32 %v64, %v70
    %v72 = vmax.f32 %v71, 0.0
    %74 = vset.pattern.permute.xlu0 0
    %75 = vperm.xlu0 %74, %v44
    %v76 = vpop.permute.xlu0 %75
    %v78 = vmin.f32 %v76, %v44
    %80 = vset.pattern.permute.xlu0 0
    %81 = vperm.xlu0 %80, %v40
    %v82 = vpop.permute.xlu0 %81
    %v84 = vmax.f32 %v82, %v40
    %v85 = vsub.f32 %v78, %v84
    %v86 = vmax.f32 %v85, 0.0
    %v87 = vmul.f32 %v72, %v86
    %v88 = vmul.f32 %v87, 1.5
    %90 = vset.pattern.permute.xlu0 0
    %91 = vperm.xlu0 %90, %v56
    %v92 = vpop.permute.xlu0 %91
    %v94 = vadd.f32 %v92, %v56
    %vm95 = vcmp.gt.f32.partialorder %v88, %v94
    %vm96 = vcmp.gt.s32.totalorder %v58, 0
    %vm97 = vmand %vm95, %vm96
    %v98 = vsel %vm50, 1, 0
    %99 = vset.pattern.permute.xlu0 0
    %100 = vperm.xlu0 %99, %v98
    %v101 = vpop.permute.xlu0 %100
    %vm102 = vcmp.eq.s32.totalorder %v101, 1
    %vm103 = vmand %vm97, %vm102
    %vm104 = vmxor %vm103, 1
    %vm105 = vmand %vm50, %vm104
    %106 = vset.pattern.permute.xlu0 1
    %107 = vperm.xlu0 %106, %v42
    %v108 = vpop.permute.xlu0 %107
    %v110 = vmin.f32 %v108, %v42
    %111 = vset.pattern.permute.xlu0 1
    %112 = vperm.xlu0 %111, %v38
    %v113 = vpop.permute.xlu0 %112
    %v115 = vmax.f32 %v113, %v38
    %v116 = vsub.f32 %v110, %v115
    %v117 = vmax.f32 %v116, 0.0
    %118 = vset.pattern.permute.xlu0 1
    %119 = vperm.xlu0 %118, %v44
    %v120 = vpop.permute.xlu0 %119
    %v122 = vmin.f32 %v120, %v44
    %123 = vset.pattern.permute.xlu0 1
    %124 = vperm.xlu0 %123, %v40
    %v125 = vpop.permute.xlu0 %124
    %v127 = vmax.f32 %v125, %v40
    %v128 = vsub.f32 %v122, %v127
    %v129 = vmax.f32 %v128, 0.0
    %v130 = vmul.f32 %v117, %v129
    %v131 = vmul.f32 %v130, 1.5
    %132 = vset.pattern.permute.xlu0 1
    %133 = vperm.xlu0 %132, %v56
    %v134 = vpop.permute.xlu0 %133
    %v136 = vadd.f32 %v134, %v56
    %vm137 = vcmp.gt.f32.partialorder %v131, %v136
    %vm138 = vcmp.gt.s32.totalorder %v58, 1
    %vm139 = vmand %vm137, %vm138
    %v140 = vsel %vm105, 1, 0
    %141 = vset.pattern.permute.xlu0 1
    %142 = vperm.xlu0 %141, %v140
    %v143 = vpop.permute.xlu0 %142
    %vm144 = vcmp.eq.s32.totalorder %v143, 1
    %vm145 = vmand %vm139, %vm144
    %vm146 = vmxor %vm145, 1
    %vm147 = vmand %vm105, %vm146
    %148 = vset.pattern.permute.xlu0 2
    %149 = vperm.xlu0 %148, %v42
    %v150 = vpop.permute.xlu0 %149
    %v152 = vmin.f32 %v150, %v42
    %153 = vset.pattern.permute.xlu0 2
    %154 = vperm.xlu0 %153, %v38
    %v155 = vpop.permute.xlu0 %154
    %v157 = vmax.f32 %v155, %v38
    %v158 = vsub.f32 %v152, %v157
    %v159 = vmax.f32 %v158, 0.0
    %160 = vset.pattern.permute.xlu0 2
    %161 = vperm.xlu0 %160, %v44
    %v162 = vpop.permute.xlu0 %161
    %v164 = vmin.f32 %v162, %v44
    %165 = vset.pattern.permute.xlu0 2
    %166 = vperm.xlu0 %165, %v40
    %v167 = vpop.permute.xlu0 %166
    %v169 = vmax.f32 %v167, %v40
    %v170 = vsub.f32 %v164, %v169
    %v171 = vmax.f32 %v170, 0.0
    %v172 = vmul.f32 %v159, %v171
    %v173 = vmul.f32 %v172, 1.5
    %174 = vset.pattern.permute.xlu0 2
    %175 = vperm.xlu0 %174, %v56
    %v176 = vpop.permute.xlu0 %175
    %v178 = vadd.f32 %v176, %v56
    %vm179 = vcmp.gt.f32.partialorder %v173, %v178
    %vm180 = vcmp.gt.s32.totalorder %v58, 2
    %vm181 = vmand %vm179, %vm180
    %v182 = vsel %vm147, 1, 0
    %183 = vset.pattern.permute.xlu0 2
    %184 = vperm.xlu0 %183, %v182
    %v185 = vpop.permute.xlu0 %184
    %vm186 = vcmp.eq.s32.totalorder %v185, 1
    %vm187 = vmand %vm181, %vm186
    %vm188 = vmxor %vm187, 1
    %vm189 = vmand %vm147, %vm188
    %190 = vset.pattern.permute.xlu0 3
    %191 = vperm.xlu0 %190, %v42
    %v192 = vpop.permute.xlu0 %191
    %v194 = vmin.f32 %v192, %v42
    %195 = vset.pattern.permute.xlu0 3
    %196 = vperm.xlu0 %195, %v38
    %v197 = vpop.permute.xlu0 %196
    %v199 = vmax.f32 %v197, %v38
    %v200 = vsub.f32 %v194, %v199
    %v201 = vmax.f32 %v200, 0.0
    %202 = vset.pattern.permute.xlu0 3
    %203 = vperm.xlu0 %202, %v44
    %v204 = vpop.permute.xlu0 %203
    %v206 = vmin.f32 %v204, %v44
    %207 = vset.pattern.permute.xlu0 3
    %208 = vperm.xlu0 %207, %v40
    %v209 = vpop.permute.xlu0 %208
    %v211 = vmax.f32 %v209, %v40
    %v212 = vsub.f32 %v206, %v211
    %v213 = vmax.f32 %v212, 0.0
    %v214 = vmul.f32 %v201, %v213
    %v215 = vmul.f32 %v214, 1.5
    %216 = vset.pattern.permute.xlu0 3
    %217 = vperm.xlu0 %216, %v56
    %v218 = vpop.permute.xlu0 %217
    %v220 = vadd.f32 %v218, %v56
    %vm221 = vcmp.gt.f32.partialorder %v215, %v220
    %vm222 = vcmp.gt.s32.totalorder %v58, 3
    %vm223 = vmand %vm221, %vm222
    %v224 = vsel %vm189, 1, 0
    %225 = vset.pattern.permute.xlu0 3
    %226 = vperm.xlu0 %225, %v224
    %v227 = vpop.permute.xlu0 %226
    %vm228 = vcmp.eq.s32.totalorder %v227, 1
    %vm229 = vmand %vm223, %vm228
    %vm230 = vmxor %vm229, 1
    %vm231 = vmand %vm189, %vm230
    %232 = vset.pattern.permute.xlu0 4
    %233 = vperm.xlu0 %232, %v42
    %v234 = vpop.permute.xlu0 %233
    %v236 = vmin.f32 %v234, %v42
    %237 = vset.pattern.permute.xlu0 4
    %238 = vperm.xlu0 %237, %v38
    %v239 = vpop.permute.xlu0 %238
    %v241 = vmax.f32 %v239, %v38
    %v242 = vsub.f32 %v236, %v241
    %v243 = vmax.f32 %v242, 0.0
    %244 = vset.pattern.permute.xlu0 4
    %245 = vperm.xlu0 %244, %v44
    %v246 = vpop.permute.xlu0 %245
    %v248 = vmin.f32 %v246, %v44
    %249 = vset.pattern.permute.xlu0 4
    %250 = vperm.xlu0 %249, %v40
    %v251 = vpop.permute.xlu0 %250
    %v253 = vmax.f32 %v251, %v40
    %v254 = vsub.f32 %v248, %v253
    %v255 = vmax.f32 %v254, 0.0
    %v256 = vmul.f32 %v243, %v255
    %v257 = vmul.f32 %v256, 1.5
    %258 = vset.pattern.permute.xlu0 4
    %259 = vperm.xlu0 %258, %v56
    %v260 = vpop.permute.xlu0 %259
    %v262 = vadd.f32 %v260, %v56
    %vm263 = vcmp.gt.f32.partialorder %v257, %v262
    %vm264 = vcmp.gt.s32.totalorder %v58, 4
    %vm265 = vmand %vm263, %vm264
    %v266 = vsel %vm231, 1, 0
    %267 = vset.pattern.permute.xlu0 4
    %268 = vperm.xlu0 %267, %v266
    %v269 = vpop.permute.xlu0 %268
    %vm270 = vcmp.eq.s32.totalorder %v269, 1
    %vm271 = vmand %vm265, %vm270
    %vm272 = vmxor %vm271, 1
    %vm273 = vmand %vm231, %vm272
    %274 = vset.pattern.permute.xlu0 5
    %275 = vperm.xlu0 %274, %v42
    %v276 = vpop.permute.xlu0 %275
    %v278 = vmin.f32 %v276, %v42
    %279 = vset.pattern.permute.xlu0 5
    %280 = vperm.xlu0 %279, %v38
    %v281 = vpop.permute.xlu0 %280
    %v283 = vmax.f32 %v281, %v38
    %v284 = vsub.f32 %v278, %v283
    %v285 = vmax.f32 %v284, 0.0
    %286 = vset.pattern.permute.xlu0 5
    %287 = vperm.xlu0 %286, %v44
    %v288 = vpop.permute.xlu0 %287
    %v290 = vmin.f32 %v288, %v44
    %291 = vset.pattern.permute.xlu0 5
    %292 = vperm.xlu0 %291, %v40
    %v293 = vpop.permute.xlu0 %292
    %v295 = vmax.f32 %v293, %v40
    %v296 = vsub.f32 %v290, %v295
    %v297 = vmax.f32 %v296, 0.0
    %v298 = vmul.f32 %v285, %v297
    %v299 = vmul.f32 %v298, 1.5
    %300 = vset.pattern.permute.xlu0 5
    %301 = vperm.xlu0 %300, %v56
    %v302 = vpop.permute.xlu0 %301
    %v304 = vadd.f32 %v302, %v56
    %vm305 = vcmp.gt.f32.partialorder %v299, %v304
    %vm306 = vcmp.gt.s32.totalorder %v58, 5
    %vm307 = vmand %vm305, %vm306
    %v308 = vsel %vm273, 1, 0
    %309 = vset.pattern.permute.xlu0 5
    %310 = vperm.xlu0 %309, %v308
    %v311 = vpop.permute.xlu0 %310
    %vm312 = vcmp.eq.s32.totalorder %v311, 1
    %vm313 = vmand %vm307, %vm312
    %vm314 = vmxor %vm313, 1
    %vm315 = vmand %vm273, %vm314
    %316 = vset.pattern.permute.xlu0 6
    %317 = vperm.xlu0 %316, %v42
    %v318 = vpop.permute.xlu0 %317
    %v320 = vmin.f32 %v318, %v42
    %321 = vset.pattern.permute.xlu0 6
    %322 = vperm.xlu0 %321, %v38
    %v323 = vpop.permute.xlu0 %322
    %v325 = vmax.f32 %v323, %v38
    %v326 = vsub.f32 %v320, %v325
    %v327 = vmax.f32 %v326, 0.0
    %328 = vset.pattern.permute.xlu0 6
    %329 = vperm.xlu0 %328, %v44
    %v330 = vpop.permute.xlu0 %329
    %v332 = vmin.f32 %v330, %v44
    %333 = vset.pattern.permute.xlu0 6
    %334 = vperm.xlu0 %333, %v40
    %v335 = vpop.permute.xlu0 %334
    %v337 = vmax.f32 %v335, %v40
    %v338 = vsub.f32 %v332, %v337
    %v339 = vmax.f32 %v338, 0.0
    %v340 = vmul.f32 %v327, %v339
    %v341 = vmul.f32 %v340, 1.5
    %342 = vset.pattern.permute.xlu0 6
    %343 = vperm.xlu0 %342, %v56
    %v344 = vpop.permute.xlu0 %343
    %v346 = vadd.f32 %v344, %v56
    %vm347 = vcmp.gt.f32.partialorder %v341, %v346
    %vm348 = vcmp.gt.s32.totalorder %v58, 6
    %vm349 = vmand %vm347, %vm348
    %v350 = vsel %vm315, 1, 0
    %351 = vset.pattern.permute.xlu0 6
    %352 = vperm.xlu0 %351, %v350
    %v353 = vpop.permute.xlu0 %352
    %vm354 = vcmp.eq.s32.totalorder %v353, 1
    %vm355 = vmand %vm349, %vm354
    %vm356 = vmxor %vm355, 1
    %vm357 = vmand %vm315, %vm356
    %358 = vset.pattern.permute.xlu0 7
    %359 = vperm.xlu0 %358, %v42
    %v360 = vpop.permute.xlu0 %359
    %v362 = vmin.f32 %v360, %v42
    %363 = vset.pattern.permute.xlu0 7
    %364 = vperm.xlu0 %363, %v38
    %v365 = vpop.permute.xlu0 %364
    %v367 = vmax.f32 %v365, %v38
    %v368 = vsub.f32 %v362, %v367
    %v369 = vmax.f32 %v368, 0.0
    %370 = vset.pattern.permute.xlu0 7
    %371 = vperm.xlu0 %370, %v44
    %v372 = vpop.permute.xlu0 %371
    %v374 = vmin.f32 %v372, %v44
    %375 = vset.pattern.permute.xlu0 7
    %376 = vperm.xlu0 %375, %v40
    %v377 = vpop.permute.xlu0 %376
    %v379 = vmax.f32 %v377, %v40
    %v380 = vsub.f32 %v374, %v379
    %v381 = vmax.f32 %v380, 0.0
    %v382 = vmul.f32 %v369, %v381
    %v383 = vmul.f32 %v382, 1.5
    %384 = vset.pattern.permute.xlu0 7
    %385 = vperm.xlu0 %384, %v56
    %v386 = vpop.permute.xlu0 %385
    %v388 = vadd.f32 %v386, %v56
    %vm389 = vcmp.gt.f32.partialorder %v383, %v388
    %vm390 = vcmp.gt.s32.totalorder %v58, 7
    %vm391 = vmand %vm389, %vm390
    %v392 = vsel %vm357, 1, 0
    %393 = vset.pattern.permute.xlu0 7
    %394 = vperm.xlu0 %393, %v392
    %v395 = vpop.permute.xlu0 %394
    %vm396 = vcmp.eq.s32.totalorder %v395, 1
    %vm397 = vmand %vm391, %vm396
    %vm398 = vmxor %vm397, 1
    %vm399 = vmand %vm357, %vm398
    %400 = vset.pattern.permute.xlu0 8
    %401 = vperm.xlu0 %400, %v42
    %v402 = vpop.permute.xlu0 %401
    %v404 = vmin.f32 %v402, %v42
    %405 = vset.pattern.permute.xlu0 8
    %406 = vperm.xlu0 %405, %v38
    %v407 = vpop.permute.xlu0 %406
    %v409 = vmax.f32 %v407, %v38
    %v410 = vsub.f32 %v404, %v409
    %v411 = vmax.f32 %v410, 0.0
    %412 = vset.pattern.permute.xlu0 8
    %413 = vperm.xlu0 %412, %v44
    %v414 = vpop.permute.xlu0 %413
    %v416 = vmin.f32 %v414, %v44
    %417 = vset.pattern.permute.xlu0 8
    %418 = vperm.xlu0 %417, %v40
    %v419 = vpop.permute.xlu0 %418
    %v421 = vmax.f32 %v419, %v40
    %v422 = vsub.f32 %v416, %v421
    %v423 = vmax.f32 %v422, 0.0
    %v424 = vmul.f32 %v411, %v423
    %v425 = vmul.f32 %v424, 1.5
    %426 = vset.pattern.permute.xlu0 8
    %427 = vperm.xlu0 %426, %v56
    %v428 = vpop.permute.xlu0 %427
    %v430 = vadd.f32 %v428, %v56
    %vm431 = vcmp.gt.f32.partialorder %v425, %v430
    %vm432 = vcmp.gt.s32.totalorder %v58, 8
    %vm433 = vmand %vm431, %vm432
    %v434 = vsel %vm399, 1, 0
    %435 = vset.pattern.permute.xlu0 8
    %436 = vperm.xlu0 %435, %v434
    %v437 = vpop.permute.xlu0 %436
    %vm438 = vcmp.eq.s32.totalorder %v437, 1
    %vm439 = vmand %vm433, %vm438
    %vm440 = vmxor %vm439, 1
    %vm441 = vmand %vm399, %vm440
    %442 = vset.pattern.permute.xlu0 9
    %443 = vperm.xlu0 %442, %v42
    %v444 = vpop.permute.xlu0 %443
    %v446 = vmin.f32 %v444, %v42
    %447 = vset.pattern.permute.xlu0 9
    %448 = vperm.xlu0 %447, %v38
    %v449 = vpop.permute.xlu0 %448
    %v451 = vmax.f32 %v449, %v38
    %v452 = vsub.f32 %v446, %v451
    %v453 = vmax.f32 %v452, 0.0
    %454 = vset.pattern.permute.xlu0 9
    %455 = vperm.xlu0 %454, %v44
    %v456 = vpop.permute.xlu0 %455
    %v458 = vmin.f32 %v456, %v44
    %459 = vset.pattern.permute.xlu0 9
    %460 = vperm.xlu0 %459, %v40
    %v461 = vpop.permute.xlu0 %460
    %v463 = vmax.f32 %v461, %v40
    %v464 = vsub.f32 %v458, %v463
    %v465 = vmax.f32 %v464, 0.0
    %v466 = vmul.f32 %v453, %v465
    %v467 = vmul.f32 %v466, 1.5
    %468 = vset.pattern.permute.xlu0 9
    %469 = vperm.xlu0 %468, %v56
    %v470 = vpop.permute.xlu0 %469
    %v472 = vadd.f32 %v470, %v56
    %vm473 = vcmp.gt.f32.partialorder %v467, %v472
    %vm474 = vcmp.gt.s32.totalorder %v58, 9
    %vm475 = vmand %vm473, %vm474
    %v476 = vsel %vm441, 1, 0
    %477 = vset.pattern.permute.xlu0 9
    %478 = vperm.xlu0 %477, %v476
    %v479 = vpop.permute.xlu0 %478
    %vm480 = vcmp.eq.s32.totalorder %v479, 1
    %vm481 = vmand %vm475, %vm480
    %vm482 = vmxor %vm481, 1
    %vm483 = vmand %vm441, %vm482
    %484 = vset.pattern.permute.xlu0 10
    %485 = vperm.xlu0 %484, %v42
    %v486 = vpop.permute.xlu0 %485
    %v488 = vmin.f32 %v486, %v42
    %489 = vset.pattern.permute.xlu0 10
    %490 = vperm.xlu0 %489, %v38
    %v491 = vpop.permute.xlu0 %490
    %v493 = vmax.f32 %v491, %v38
    %v494 = vsub.f32 %v488, %v493
    %v495 = vmax.f32 %v494, 0.0
    %496 = vset.pattern.permute.xlu0 10
    %497 = vperm.xlu0 %496, %v44
    %v498 = vpop.permute.xlu0 %497
    %v500 = vmin.f32 %v498, %v44
    %501 = vset.pattern.permute.xlu0 10
    %502 = vperm.xlu0 %501, %v40
    %v503 = vpop.permute.xlu0 %502
    %v505 = vmax.f32 %v503, %v40
    %v506 = vsub.f32 %v500, %v505
    %v507 = vmax.f32 %v506, 0.0
    %v508 = vmul.f32 %v495, %v507
    %v509 = vmul.f32 %v508, 1.5
    %510 = vset.pattern.permute.xlu0 10
    %511 = vperm.xlu0 %510, %v56
    %v512 = vpop.permute.xlu0 %511
    %v514 = vadd.f32 %v512, %v56
    %vm515 = vcmp.gt.f32.partialorder %v509, %v514
    %vm516 = vcmp.gt.s32.totalorder %v58, 10
    %vm517 = vmand %vm515, %vm516
    %v518 = vsel %vm483, 1, 0
    %519 = vset.pattern.permute.xlu0 10
    %520 = vperm.xlu0 %519, %v518
    %v521 = vpop.permute.xlu0 %520
    %vm522 = vcmp.eq.s32.totalorder %v521, 1
    %vm523 = vmand %vm517, %vm522
    %vm524 = vmxor %vm523, 1
    %vm525 = vmand %vm483, %vm524
    %526 = vset.pattern.permute.xlu0 11
    %527 = vperm.xlu0 %526, %v42
    %v528 = vpop.permute.xlu0 %527
    %v530 = vmin.f32 %v528, %v42
    %531 = vset.pattern.permute.xlu0 11
    %532 = vperm.xlu0 %531, %v38
    %v533 = vpop.permute.xlu0 %532
    %v535 = vmax.f32 %v533, %v38
    %v536 = vsub.f32 %v530, %v535
    %v537 = vmax.f32 %v536, 0.0
    %538 = vset.pattern.permute.xlu0 11
    %539 = vperm.xlu0 %538, %v44
    %v540 = vpop.permute.xlu0 %539
    %v542 = vmin.f32 %v540, %v44
    %543 = vset.pattern.permute.xlu0 11
    %544 = vperm.xlu0 %543, %v40
    %v545 = vpop.permute.xlu0 %544
    %v547 = vmax.f32 %v545, %v40
    %v548 = vsub.f32 %v542, %v547
    %v549 = vmax.f32 %v548, 0.0
    %v550 = vmul.f32 %v537, %v549
    %v551 = vmul.f32 %v550, 1.5
    %552 = vset.pattern.permute.xlu0 11
    %553 = vperm.xlu0 %552, %v56
    %v554 = vpop.permute.xlu0 %553
    %v556 = vadd.f32 %v554, %v56
    %vm557 = vcmp.gt.f32.partialorder %v551, %v556
    %vm558 = vcmp.gt.s32.totalorder %v58, 11
    %vm559 = vmand %vm557, %vm558
    %v560 = vsel %vm525, 1, 0
    %561 = vset.pattern.permute.xlu0 11
    %562 = vperm.xlu0 %561, %v560
    %v563 = vpop.permute.xlu0 %562
    %vm564 = vcmp.eq.s32.totalorder %v563, 1
    %vm565 = vmand %vm559, %vm564
    %vm566 = vmxor %vm565, 1
    %vm567 = vmand %vm525, %vm566
    %568 = vset.pattern.permute.xlu0 12
    %569 = vperm.xlu0 %568, %v42
    %v570 = vpop.permute.xlu0 %569
    %v572 = vmin.f32 %v570, %v42
    %573 = vset.pattern.permute.xlu0 12
    %574 = vperm.xlu0 %573, %v38
    %v575 = vpop.permute.xlu0 %574
    %v577 = vmax.f32 %v575, %v38
    %v578 = vsub.f32 %v572, %v577
    %v579 = vmax.f32 %v578, 0.0
    %580 = vset.pattern.permute.xlu0 12
    %581 = vperm.xlu0 %580, %v44
    %v582 = vpop.permute.xlu0 %581
    %v584 = vmin.f32 %v582, %v44
    %585 = vset.pattern.permute.xlu0 12
    %586 = vperm.xlu0 %585, %v40
    %v587 = vpop.permute.xlu0 %586
    %v589 = vmax.f32 %v587, %v40
    %v590 = vsub.f32 %v584, %v589
    %v591 = vmax.f32 %v590, 0.0
    %v592 = vmul.f32 %v579, %v591
    %v593 = vmul.f32 %v592, 1.5
    %594 = vset.pattern.permute.xlu0 12
    %595 = vperm.xlu0 %594, %v56
    %v596 = vpop.permute.xlu0 %595
    %v598 = vadd.f32 %v596, %v56
    %vm599 = vcmp.gt.f32.partialorder %v593, %v598
    %vm600 = vcmp.gt.s32.totalorder %v58, 12
    %vm601 = vmand %vm599, %vm600
    %v602 = vsel %vm567, 1, 0
    %603 = vset.pattern.permute.xlu0 12
    %604 = vperm.xlu0 %603, %v602
    %v605 = vpop.permute.xlu0 %604
    %vm606 = vcmp.eq.s32.totalorder %v605, 1
    %vm607 = vmand %vm601, %vm606
    %vm608 = vmxor %vm607, 1
    %vm609 = vmand %vm567, %vm608
    %610 = vset.pattern.permute.xlu0 13
    %611 = vperm.xlu0 %610, %v42
    %v612 = vpop.permute.xlu0 %611
    %v614 = vmin.f32 %v612, %v42
    %615 = vset.pattern.permute.xlu0 13
    %616 = vperm.xlu0 %615, %v38
    %v617 = vpop.permute.xlu0 %616
    %v619 = vmax.f32 %v617, %v38
    %v620 = vsub.f32 %v614, %v619
    %v621 = vmax.f32 %v620, 0.0
    %622 = vset.pattern.permute.xlu0 13
    %623 = vperm.xlu0 %622, %v44
    %v624 = vpop.permute.xlu0 %623
    %v626 = vmin.f32 %v624, %v44
    %627 = vset.pattern.permute.xlu0 13
    %628 = vperm.xlu0 %627, %v40
    %v629 = vpop.permute.xlu0 %628
    %v631 = vmax.f32 %v629, %v40
    %v632 = vsub.f32 %v626, %v631
    %v633 = vmax.f32 %v632, 0.0
    %v634 = vmul.f32 %v621, %v633
    %v635 = vmul.f32 %v634, 1.5
    %636 = vset.pattern.permute.xlu0 13
    %637 = vperm.xlu0 %636, %v56
    %v638 = vpop.permute.xlu0 %637
    %v640 = vadd.f32 %v638, %v56
    %vm641 = vcmp.gt.f32.partialorder %v635, %v640
    %vm642 = vcmp.gt.s32.totalorder %v58, 13
    %vm643 = vmand %vm641, %vm642
    %v644 = vsel %vm609, 1, 0
    %645 = vset.pattern.permute.xlu0 13
    %646 = vperm.xlu0 %645, %v644
    %v647 = vpop.permute.xlu0 %646
    %vm648 = vcmp.eq.s32.totalorder %v647, 1
    %vm649 = vmand %vm643, %vm648
    %vm650 = vmxor %vm649, 1
    %vm651 = vmand %vm609, %vm650
    %652 = vset.pattern.permute.xlu0 14
    %653 = vperm.xlu0 %652, %v42
    %v654 = vpop.permute.xlu0 %653
    %v656 = vmin.f32 %v654, %v42
    %657 = vset.pattern.permute.xlu0 14
    %658 = vperm.xlu0 %657, %v38
    %v659 = vpop.permute.xlu0 %658
    %v661 = vmax.f32 %v659, %v38
    %v662 = vsub.f32 %v656, %v661
    %v663 = vmax.f32 %v662, 0.0
    %664 = vset.pattern.permute.xlu0 14
    %665 = vperm.xlu0 %664, %v44
    %v666 = vpop.permute.xlu0 %665
    %v668 = vmin.f32 %v666, %v44
    %669 = vset.pattern.permute.xlu0 14
    %670 = vperm.xlu0 %669, %v40
    %v671 = vpop.permute.xlu0 %670
    %v673 = vmax.f32 %v671, %v40
    %v674 = vsub.f32 %v668, %v673
    %v675 = vmax.f32 %v674, 0.0
    %v676 = vmul.f32 %v663, %v675
    %v677 = vmul.f32 %v676, 1.5
    %678 = vset.pattern.permute.xlu0 14
    %679 = vperm.xlu0 %678, %v56
    %v680 = vpop.permute.xlu0 %679
    %v682 = vadd.f32 %v680, %v56
    %vm683 = vcmp.gt.f32.partialorder %v677, %v682
    %vm684 = vcmp.gt.s32.totalorder %v58, 14
    %vm685 = vmand %vm683, %vm684
    %v686 = vsel %vm651, 1, 0
    %687 = vset.pattern.permute.xlu0 14
    %688 = vperm.xlu0 %687, %v686
    %v689 = vpop.permute.xlu0 %688
    %vm690 = vcmp.eq.s32.totalorder %v689, 1
    %vm691 = vmand %vm685, %vm690
    %vm692 = vmxor %vm691, 1
    %vm693 = vmand %vm651, %vm692
    %694 = vset.pattern.permute.xlu0 15
    %695 = vperm.xlu0 %694, %v42
    %v696 = vpop.permute.xlu0 %695
    %v698 = vmin.f32 %v696, %v42
    %699 = vset.pattern.permute.xlu0 15
    %700 = vperm.xlu0 %699, %v38
    %v701 = vpop.permute.xlu0 %700
    %v703 = vmax.f32 %v701, %v38
    %v704 = vsub.f32 %v698, %v703
    %v705 = vmax.f32 %v704, 0.0
    %706 = vset.pattern.permute.xlu0 15
    %707 = vperm.xlu0 %706, %v44
    %v708 = vpop.permute.xlu0 %707
    %v710 = vmin.f32 %v708, %v44
    %711 = vset.pattern.permute.xlu0 15
    %712 = vperm.xlu0 %711, %v40
    %v713 = vpop.permute.xlu0 %712
    %v715 = vmax.f32 %v713, %v40
    %v716 = vsub.f32 %v710, %v715
    %v717 = vmax.f32 %v716, 0.0
    %v718 = vmul.f32 %v705, %v717
    %v719 = vmul.f32 %v718, 1.5
    %720 = vset.pattern.permute.xlu0 15
    %721 = vperm.xlu0 %720, %v56
    %v722 = vpop.permute.xlu0 %721
    %v724 = vadd.f32 %v722, %v56
    %vm725 = vcmp.gt.f32.partialorder %v719, %v724
    %vm726 = vcmp.gt.s32.totalorder %v58, 15
    %vm727 = vmand %vm725, %vm726
    %v728 = vsel %vm693, 1, 0
    %729 = vset.pattern.permute.xlu0 15
    %730 = vperm.xlu0 %729, %v728
    %v731 = vpop.permute.xlu0 %730
    %vm732 = vcmp.eq.s32.totalorder %v731, 1
    %vm733 = vmand %vm727, %vm732
    %vm734 = vmxor %vm733, 1
    %vm735 = vmand %vm693, %vm734
    %736 = vset.pattern.permute.xlu0 16
    %737 = vperm.xlu0 %736, %v42
    %v738 = vpop.permute.xlu0 %737
    %v740 = vmin.f32 %v738, %v42
    %741 = vset.pattern.permute.xlu0 16
    %742 = vperm.xlu0 %741, %v38
    %v743 = vpop.permute.xlu0 %742
    %v745 = vmax.f32 %v743, %v38
    %v746 = vsub.f32 %v740, %v745
    %v747 = vmax.f32 %v746, 0.0
    %748 = vset.pattern.permute.xlu0 16
    %749 = vperm.xlu0 %748, %v44
    %v750 = vpop.permute.xlu0 %749
    %v752 = vmin.f32 %v750, %v44
    %753 = vset.pattern.permute.xlu0 16
    %754 = vperm.xlu0 %753, %v40
    %v755 = vpop.permute.xlu0 %754
    %v757 = vmax.f32 %v755, %v40
    %v758 = vsub.f32 %v752, %v757
    %v759 = vmax.f32 %v758, 0.0
    %v760 = vmul.f32 %v747, %v759
    %v761 = vmul.f32 %v760, 1.5
    %762 = vset.pattern.permute.xlu0 16
    %763 = vperm.xlu0 %762, %v56
    %v764 = vpop.permute.xlu0 %763
    %v766 = vadd.f32 %v764, %v56
    %vm767 = vcmp.gt.f32.partialorder %v761, %v766
    %vm768 = vcmp.gt.s32.totalorder %v58, 16
    %vm769 = vmand %vm767, %vm768
    %v770 = vsel %vm735, 1, 0
    %771 = vset.pattern.permute.xlu0 16
    %772 = vperm.xlu0 %771, %v770
    %v773 = vpop.permute.xlu0 %772
    %vm774 = vcmp.eq.s32.totalorder %v773, 1
    %vm775 = vmand %vm769, %vm774
    %vm776 = vmxor %vm775, 1
    %vm777 = vmand %vm735, %vm776
    %778 = vset.pattern.permute.xlu0 17
    %779 = vperm.xlu0 %778, %v42
    %v780 = vpop.permute.xlu0 %779
    %v782 = vmin.f32 %v780, %v42
    %783 = vset.pattern.permute.xlu0 17
    %784 = vperm.xlu0 %783, %v38
    %v785 = vpop.permute.xlu0 %784
    %v787 = vmax.f32 %v785, %v38
    %v788 = vsub.f32 %v782, %v787
    %v789 = vmax.f32 %v788, 0.0
    %790 = vset.pattern.permute.xlu0 17
    %791 = vperm.xlu0 %790, %v44
    %v792 = vpop.permute.xlu0 %791
    %v794 = vmin.f32 %v792, %v44
    %795 = vset.pattern.permute.xlu0 17
    %796 = vperm.xlu0 %795, %v40
    %v797 = vpop.permute.xlu0 %796
    %v799 = vmax.f32 %v797, %v40
    %v800 = vsub.f32 %v794, %v799
    %v801 = vmax.f32 %v800, 0.0
    %v802 = vmul.f32 %v789, %v801
    %v803 = vmul.f32 %v802, 1.5
    %804 = vset.pattern.permute.xlu0 17
    %805 = vperm.xlu0 %804, %v56
    %v806 = vpop.permute.xlu0 %805
    %v808 = vadd.f32 %v806, %v56
    %vm809 = vcmp.gt.f32.partialorder %v803, %v808
    %vm810 = vcmp.gt.s32.totalorder %v58, 17
    %vm811 = vmand %vm809, %vm810
    %v812 = vsel %vm777, 1, 0
    %813 = vset.pattern.permute.xlu0 17
    %814 = vperm.xlu0 %813, %v812
    %v815 = vpop.permute.xlu0 %814
    %vm816 = vcmp.eq.s32.totalorder %v815, 1
    %vm817 = vmand %vm811, %vm816
    %vm818 = vmxor %vm817, 1
    %vm819 = vmand %vm777, %vm818
    %820 = vset.pattern.permute.xlu0 18
    %821 = vperm.xlu0 %820, %v42
    %v822 = vpop.permute.xlu0 %821
    %v824 = vmin.f32 %v822, %v42
    %825 = vset.pattern.permute.xlu0 18
    %826 = vperm.xlu0 %825, %v38
    %v827 = vpop.permute.xlu0 %826
    %v829 = vmax.f32 %v827, %v38
    %v830 = vsub.f32 %v824, %v829
    %v831 = vmax.f32 %v830, 0.0
    %832 = vset.pattern.permute.xlu0 18
    %833 = vperm.xlu0 %832, %v44
    %v834 = vpop.permute.xlu0 %833
    %v836 = vmin.f32 %v834, %v44
    %837 = vset.pattern.permute.xlu0 18
    %838 = vperm.xlu0 %837, %v40
    %v839 = vpop.permute.xlu0 %838
    %v841 = vmax.f32 %v839, %v40
    %v842 = vsub.f32 %v836, %v841
    %v843 = vmax.f32 %v842, 0.0
    %v844 = vmul.f32 %v831, %v843
    %v845 = vmul.f32 %v844, 1.5
    %846 = vset.pattern.permute.xlu0 18
    %847 = vperm.xlu0 %846, %v56
    %v848 = vpop.permute.xlu0 %847
    %v850 = vadd.f32 %v848, %v56
    %vm851 = vcmp.gt.f32.partialorder %v845, %v850
    %vm852 = vcmp.gt.s32.totalorder %v58, 18
    %vm853 = vmand %vm851, %vm852
    %v854 = vsel %vm819, 1, 0
    %855 = vset.pattern.permute.xlu0 18
    %856 = vperm.xlu0 %855, %v854
    %v857 = vpop.permute.xlu0 %856
    %vm858 = vcmp.eq.s32.totalorder %v857, 1
    %vm859 = vmand %vm853, %vm858
    %vm860 = vmxor %vm859, 1
    %vm861 = vmand %vm819, %vm860
    %862 = vset.pattern.permute.xlu0 19
    %863 = vperm.xlu0 %862, %v42
    %v864 = vpop.permute.xlu0 %863
    %v866 = vmin.f32 %v864, %v42
    %867 = vset.pattern.permute.xlu0 19
    %868 = vperm.xlu0 %867, %v38
    %v869 = vpop.permute.xlu0 %868
    %v871 = vmax.f32 %v869, %v38
    %v872 = vsub.f32 %v866, %v871
    %v873 = vmax.f32 %v872, 0.0
    %874 = vset.pattern.permute.xlu0 19
    %875 = vperm.xlu0 %874, %v44
    %v876 = vpop.permute.xlu0 %875
    %v878 = vmin.f32 %v876, %v44
    %879 = vset.pattern.permute.xlu0 19
    %880 = vperm.xlu0 %879, %v40
    %v881 = vpop.permute.xlu0 %880
    %v883 = vmax.f32 %v881, %v40
    %v884 = vsub.f32 %v878, %v883
    %v885 = vmax.f32 %v884, 0.0
    %v886 = vmul.f32 %v873, %v885
    %v887 = vmul.f32 %v886, 1.5
    %888 = vset.pattern.permute.xlu0 19
    %889 = vperm.xlu0 %888, %v56
    %v890 = vpop.permute.xlu0 %889
    %v892 = vadd.f32 %v890, %v56
    %vm893 = vcmp.gt.f32.partialorder %v887, %v892
    %vm894 = vcmp.gt.s32.totalorder %v58, 19
    %vm895 = vmand %vm893, %vm894
    %v896 = vsel %vm861, 1, 0
    %897 = vset.pattern.permute.xlu0 19
    %898 = vperm.xlu0 %897, %v896
    %v899 = vpop.permute.xlu0 %898
    %vm900 = vcmp.eq.s32.totalorder %v899, 1
    %vm901 = vmand %vm895, %vm900
    %vm902 = vmxor %vm901, 1
    %vm903 = vmand %vm861, %vm902
    %904 = vset.pattern.permute.xlu0 20
    %905 = vperm.xlu0 %904, %v42
    %v906 = vpop.permute.xlu0 %905
    %v908 = vmin.f32 %v906, %v42
    %909 = vset.pattern.permute.xlu0 20
    %910 = vperm.xlu0 %909, %v38
    %v911 = vpop.permute.xlu0 %910
    %v913 = vmax.f32 %v911, %v38
    %v914 = vsub.f32 %v908, %v913
    %v915 = vmax.f32 %v914, 0.0
    %916 = vset.pattern.permute.xlu0 20
    %917 = vperm.xlu0 %916, %v44
    %v918 = vpop.permute.xlu0 %917
    %v920 = vmin.f32 %v918, %v44
    %921 = vset.pattern.permute.xlu0 20
    %922 = vperm.xlu0 %921, %v40
    %v923 = vpop.permute.xlu0 %922
    %v925 = vmax.f32 %v923, %v40
    %v926 = vsub.f32 %v920, %v925
    %v927 = vmax.f32 %v926, 0.0
    %v928 = vmul.f32 %v915, %v927
    %v929 = vmul.f32 %v928, 1.5
    %930 = vset.pattern.permute.xlu0 20
    %931 = vperm.xlu0 %930, %v56
    %v932 = vpop.permute.xlu0 %931
    %v934 = vadd.f32 %v932, %v56
    %vm935 = vcmp.gt.f32.partialorder %v929, %v934
    %vm936 = vcmp.gt.s32.totalorder %v58, 20
    %vm937 = vmand %vm935, %vm936
    %v938 = vsel %vm903, 1, 0
    %939 = vset.pattern.permute.xlu0 20
    %940 = vperm.xlu0 %939, %v938
    %v941 = vpop.permute.xlu0 %940
    %vm942 = vcmp.eq.s32.totalorder %v941, 1
    %vm943 = vmand %vm937, %vm942
    %vm944 = vmxor %vm943, 1
    %vm945 = vmand %vm903, %vm944
    %946 = vset.pattern.permute.xlu0 21
    %947 = vperm.xlu0 %946, %v42
    %v948 = vpop.permute.xlu0 %947
    %v950 = vmin.f32 %v948, %v42
    %951 = vset.pattern.permute.xlu0 21
    %952 = vperm.xlu0 %951, %v38
    %v953 = vpop.permute.xlu0 %952
    %v955 = vmax.f32 %v953, %v38
    %v956 = vsub.f32 %v950, %v955
    %v957 = vmax.f32 %v956, 0.0
    %958 = vset.pattern.permute.xlu0 21
    %959 = vperm.xlu0 %958, %v44
    %v960 = vpop.permute.xlu0 %959
    %v962 = vmin.f32 %v960, %v44
    %963 = vset.pattern.permute.xlu0 21
    %964 = vperm.xlu0 %963, %v40
    %v965 = vpop.permute.xlu0 %964
    %v967 = vmax.f32 %v965, %v40
    %v968 = vsub.f32 %v962, %v967
    %v969 = vmax.f32 %v968, 0.0
    %v970 = vmul.f32 %v957, %v969
    %v971 = vmul.f32 %v970, 1.5
    %972 = vset.pattern.permute.xlu0 21
    %973 = vperm.xlu0 %972, %v56
    %v974 = vpop.permute.xlu0 %973
    %v976 = vadd.f32 %v974, %v56
    %vm977 = vcmp.gt.f32.partialorder %v971, %v976
    %vm978 = vcmp.gt.s32.totalorder %v58, 21
    %vm979 = vmand %vm977, %vm978
    %v980 = vsel %vm945, 1, 0
    %981 = vset.pattern.permute.xlu0 21
    %982 = vperm.xlu0 %981, %v980
    %v983 = vpop.permute.xlu0 %982
    %vm984 = vcmp.eq.s32.totalorder %v983, 1
    %vm985 = vmand %vm979, %vm984
    %vm986 = vmxor %vm985, 1
    %vm987 = vmand %vm945, %vm986
    %988 = vset.pattern.permute.xlu0 22
    %989 = vperm.xlu0 %988, %v42
    %v990 = vpop.permute.xlu0 %989
    %v992 = vmin.f32 %v990, %v42
    %993 = vset.pattern.permute.xlu0 22
    %994 = vperm.xlu0 %993, %v38
    %v995 = vpop.permute.xlu0 %994
    %v997 = vmax.f32 %v995, %v38
    %v998 = vsub.f32 %v992, %v997
    %v999 = vmax.f32 %v998, 0.0
    %1000 = vset.pattern.permute.xlu0 22
    %1001 = vperm.xlu0 %1000, %v44
    %v1002 = vpop.permute.xlu0 %1001
    %v1004 = vmin.f32 %v1002, %v44
    %1005 = vset.pattern.permute.xlu0 22
    %1006 = vperm.xlu0 %1005, %v40
    %v1007 = vpop.permute.xlu0 %1006
    %v1009 = vmax.f32 %v1007, %v40
    %v1010 = vsub.f32 %v1004, %v1009
    %v1011 = vmax.f32 %v1010, 0.0
    %v1012 = vmul.f32 %v999, %v1011
    %v1013 = vmul.f32 %v1012, 1.5
    %1014 = vset.pattern.permute.xlu0 22
    %1015 = vperm.xlu0 %1014, %v56
    %v1016 = vpop.permute.xlu0 %1015
    %v1018 = vadd.f32 %v1016, %v56
    %vm1019 = vcmp.gt.f32.partialorder %v1013, %v1018
    %vm1020 = vcmp.gt.s32.totalorder %v58, 22
    %vm1021 = vmand %vm1019, %vm1020
    %v1022 = vsel %vm987, 1, 0
    %1023 = vset.pattern.permute.xlu0 22
    %1024 = vperm.xlu0 %1023, %v1022
    %v1025 = vpop.permute.xlu0 %1024
    %vm1026 = vcmp.eq.s32.totalorder %v1025, 1
    %vm1027 = vmand %vm1021, %vm1026
    %vm1028 = vmxor %vm1027, 1
    %vm1029 = vmand %vm987, %vm1028
    %1030 = vset.pattern.permute.xlu0 23
    %1031 = vperm.xlu0 %1030, %v42
    %v1032 = vpop.permute.xlu0 %1031
    %v1034 = vmin.f32 %v1032, %v42
    %1035 = vset.pattern.permute.xlu0 23
    %1036 = vperm.xlu0 %1035, %v38
    %v1037 = vpop.permute.xlu0 %1036
    %v1039 = vmax.f32 %v1037, %v38
    %v1040 = vsub.f32 %v1034, %v1039
    %v1041 = vmax.f32 %v1040, 0.0
    %1042 = vset.pattern.permute.xlu0 23
    %1043 = vperm.xlu0 %1042, %v44
    %v1044 = vpop.permute.xlu0 %1043
    %v1046 = vmin.f32 %v1044, %v44
    %1047 = vset.pattern.permute.xlu0 23
    %1048 = vperm.xlu0 %1047, %v40
    %v1049 = vpop.permute.xlu0 %1048
    %v1051 = vmax.f32 %v1049, %v40
    %v1052 = vsub.f32 %v1046, %v1051
    %v1053 = vmax.f32 %v1052, 0.0
    %v1054 = vmul.f32 %v1041, %v1053
    %v1055 = vmul.f32 %v1054, 1.5
    %1056 = vset.pattern.permute.xlu0 23
    %1057 = vperm.xlu0 %1056, %v56
    %v1058 = vpop.permute.xlu0 %1057
    %v1060 = vadd.f32 %v1058, %v56
    %vm1061 = vcmp.gt.f32.partialorder %v1055, %v1060
    %vm1062 = vcmp.gt.s32.totalorder %v58, 23
    %vm1063 = vmand %vm1061, %vm1062
    %v1064 = vsel %vm1029, 1, 0
    %1065 = vset.pattern.permute.xlu0 23
    %1066 = vperm.xlu0 %1065, %v1064
    %v1067 = vpop.permute.xlu0 %1066
    %vm1068 = vcmp.eq.s32.totalorder %v1067, 1
    %vm1069 = vmand %vm1063, %vm1068
    %vm1070 = vmxor %vm1069, 1
    %vm1071 = vmand %vm1029, %vm1070
    %v1072 = vsel %vm1071, %v45, -1e+30
    %1073 = vst [vmem:[#allocation7] sm:$0xff] %v1072
    // Predicated region
    $region18: #{tpu_custom_call.1} parent=1 // pred_check
      _
    $region19: #{tpu_custom_call.1} parent=1 // pred_check_branch
      %1075 = sbr.rel (0) target = $region21
    $region20: #{tpu_custom_call.1} parent=1 // pred_region
      %s1077 = ssub.s32 128, 128
      %1078 = vsyncadd [#allocation4], %s1077
      %s1080 = sshll.u32 [#allocation7], 4
      %s1081 = int_to_ptr.vmem [resolvable:$true] %s1080
      %1083 = dma.vmem_to_hbm [thread:$0]  %s1081, 128, %s2, [#allocation4]
    $region21: #{tpu_custom_call.1} parent=1 // pred_fallthru
      _
    // Predicated region
    $region22: #{tpu_custom_call.1} parent=1 // pred_check
      _
    $region23: #{tpu_custom_call.1} parent=1 // pred_check_branch
      %1085 = sbr.rel (0) target = $region25
    $region24: #{tpu_custom_call.1} parent=1 // pred_region
      %1086 = dma.done [#allocation4], 128
    $region25: #{tpu_custom_call.1} parent=1 // pred_fallthru
      _
    %1087 = vsyncpa [#allocation3], 1
    %1088 = vsyncpa [#allocation6], 1
    %1089 = vsyncpa [#allocation4], 1

</llo_original>
